<compile_context>
chip_gen: v5e
topology: v5e:2x2
jax: 0.10.0
libtpu: 0.0.40
codegen_flags: <defaults>
</compile_context>

<pallas_src>
import math
import numpy as np
import jax
import jax.numpy as jnp
from jax.experimental import pallas as pl
from jax.experimental.pallas import tpu as pltpu

# ---------------- model hyper-parameters (small, consistent with module) ----
B = 2          # batch
S = 8          # n_chan  (== transformer sequence length)
F = 20         # f_dim
E = 32         # e_dim   (== d_model == dim_feedforward == decoder h_dim)
NHEAD = 4
HD = E // NHEAD
NLAYER = 2
O = 16         # out_dim
BS = B * S     # folded (batch * seq) rows processed in a single grid step
LN_EPS = 1e-5
_DEC_B_ROW = 7 * NLAYER   # row of the decoder bias in the packed vec stack


# ----------------------------- Pallas kernel --------------------------------
def attention_kernel(x_ref, peb_ref, amask_ref, sqw_ref, vec_ref,
                     qkvw_ref, qkvb_ref, o_ref):
    f32 = jnp.float32
    bf16 = jnp.bfloat16

    def row(i):                      # (1, E) f32 row of the packed vec stack
        return vec_ref[i:i + 1, :]

    def ln(x, gamma, beta):
        # two independent cross-lane reductions: var = E[x^2] - mu^2
        mu = jnp.mean(x, axis=-1, keepdims=True)
        ms = jnp.mean(x * x, axis=-1, keepdims=True)
        var = ms - mu * mu
        return (x - mu) * jax.lax.rsqrt(var + LN_EPS) * gamma + beta

    # ---- Encoder: Linear(F->E) (sqrt(E) folded) + enc bias + pos-enc -------
    h = (jnp.dot(x_ref[...], sqw_ref[0], preferred_element_type=f32)
         + peb_ref[...])                                        # (BS, E) f32

    amask = amask_ref[...]                                      # (NHEAD*BS, BS)

    # ---- TransformerEncoder (post-norm, ReLU FFN, dropout = identity) ------
    for l in range(NLAYER):
        vbase = 7 * l
        wbase = 2 + 3 * l

        # fused QKV projection: one (BS, 3E) matmul, 1/sqrt(HD) folded into Q
        qkv = (jnp.dot(h.astype(bf16), qkvw_ref[l],
                       preferred_element_type=f32)
               + qkvb_ref[l:l + 1, :])                          # (BS, 3E) f32
        qkv_b = qkv.astype(bf16)

        # per-head scores, stacked along sublanes -> one batched softmax
        s_parts = []
        for hd in range(NHEAD):
            qh = qkv_b[:, hd * HD:(hd + 1) * HD]                # (BS, HD)
            kh = qkv_b[:, E + hd * HD:E + (hd + 1) * HD]        # (BS, HD)
            s_parts.append(jax.lax.dot_general(
                qh, kh, (((1,), (1,)), ((), ())),
                preferred_element_type=f32))                    # (BS, BS)
        s = jnp.concatenate(s_parts, axis=0) + amask            # (NHEAD*BS, BS)
        s = s - jnp.max(s, axis=-1, keepdims=True)
        p = jnp.exp(s)
        p = p * pl.reciprocal(jnp.sum(p, axis=-1, keepdims=True), approx=True)
        p_b = p.astype(bf16)

        # per-head PV, lane-concatenated into one (BS, E) tensor
        pv_parts = []
        for hd in range(NHEAD):
            vh = qkv_b[:, 2 * E + hd * HD:2 * E + (hd + 1) * HD]   # (BS, HD)
            pv_parts.append(jnp.dot(p_b[hd * BS:(hd + 1) * BS, :], vh,
                                    preferred_element_type=f32))   # (BS, HD)
        pv = jnp.concatenate(pv_parts, axis=-1)                 # (BS, E) f32

        # fused output projection (single K=E matmul) + bias
        attn = (jnp.dot(pv.astype(bf16), sqw_ref[wbase],
                        preferred_element_type=f32)
                + row(vbase + 0))                               # (BS, E)

        h = ln(h + attn, row(vbase + 1), row(vbase + 2))

        # feed-forward: Linear(E->E) -> ReLU -> Linear(E->E)
        ff = (jnp.dot(h.astype(bf16), sqw_ref[wbase + 1],
                      preferred_element_type=f32) + row(vbase + 3))
        ff = jnp.maximum(ff, 0.0)
        ff = (jnp.dot(ff.astype(bf16), sqw_ref[wbase + 2],
                      preferred_element_type=f32) + row(vbase + 4))

        h = ln(h + ff, row(vbase + 5), row(vbase + 6))

    # ---- Decoder: Linear(E->O) (weight/bias zero-padded to E columns) ------
    # Write the full lane-dense (BS, E) slab; host slices [:, :O].
    o_ref[...] = (jnp.dot(h.astype(bf16), sqw_ref[1],
                          preferred_element_type=f32)
                  + row(_DEC_B_ROW))


# --------------------- host-side parameter packing --------------------------
def pack_params(params):
    (pe, enc_w, enc_b, inW, inB, outW, outB,
     ln1g, ln1b, l1W, l1b, l2W, l2b, ln2g, ln2b, dec_w, dec_b) = params
    sqE = math.sqrt(E)
    inv_sq_hd = 1.0 / math.sqrt(HD)

    # positional encoding tiled over folded rows + encoder bias * sqrt(E)
    peb = jnp.tile(pe, (B, 1)) + enc_b * sqE                     # (BS, E) f32

    # block-diagonal additive mask (0 within batch element, -1e30 across),
    # replicated per head: (NHEAD*BS, BS)
    rows = np.arange(BS) // S
    amask = np.where(rows[:, None] == rows[None, :],
                     0.0, -1e30).astype(np.float32)
    amask4 = jnp.asarray(np.tile(amask, (NHEAD, 1)))

    # square-weight stack (in, out) layout, bf16:
    #   [enc, dec, wo_0, l1W_0, l2W_0, wo_1, l1W_1, l2W_1]
    enc_w_k = jnp.zeros((E, E), jnp.float32).at[:F, :].set(enc_w.T * sqE)
    dec_w_k = jnp.zeros((E, E), jnp.float32).at[:, :O].set(dec_w.T)
    sq = [enc_w_k, dec_w_k]
    for l in range(NLAYER):
        sq += [outW[l].T, l1W[l].T, l2W[l].T]
    sqw = jnp.stack(sq, 0).astype(jnp.bfloat16)                  # (2+3L, E, E)

    # lane-dense row-vector stack (NV, E) f32:
    #   per layer: [outB, ln1g, ln1b, l1b, l2b, ln2g, ln2b]; then dec_b (padded)
    vec = []
    for l in range(NLAYER):
        vec += [outB[l], ln1g[l], ln1b[l], l1b[l], l2b[l], ln2g[l], ln2b[l]]
    vec.append(jnp.zeros((1, E), jnp.float32).at[:, :O].set(dec_b))
    vec = jnp.concatenate(vec, axis=0)                           # (NV, E)

    # fused QKV weights (E_in, 3E_out) bf16 and bias (3E,) f32,
    # with 1/sqrt(HD) folded into the Q columns
    inW_np = np.asarray(inW)                                     # (L, 3E, E)
    inB_np = np.asarray(inB)                                     # (L, 1, 3E)
    scale = np.concatenate([np.full(E, inv_sq_hd, np.float32),
                            np.ones(2 * E, np.float32)])
    qkvw = jnp.asarray(np.transpose(inW_np, (0, 2, 1)) * scale[None, None, :]
                       ).astype(jnp.bfloat16)                    # (L, E, 3E)
    qkvb = jnp.asarray((inB_np[:, 0, :] * scale[None, :]
                        ).astype(np.float32))                    # (L, 3E)

    return peb, amask4, sqw, vec, qkvw, qkvb


def _full_spec(a):
    nd = a.ndim
    return pl.BlockSpec(a.shape, lambda i, _nd=nd: (0,) * _nd)


def attention_forward(x, params):
    """x: (B, S, F) float32  ->  (B, S*O) float32."""
    peb, amask4, sqw, vec, qkvw, qkvb = pack_params(params)
    # fold batch into rows, zero-pad features to E (matches zero-padded weight
    # rows -> exact same result), cast to bf16 for the MXU
    x_k = jnp.pad(x.reshape(BS, F), ((0, 0), (0, E - F))).astype(jnp.bfloat16)

    inputs = (x_k, peb, amask4, sqw, vec, qkvw, qkvb)
    out = pl.pallas_call(
        attention_kernel,
        out_shape=jax.ShapeDtypeStruct((BS, E), jnp.float32),
        grid_spec=pltpu.PrefetchScalarGridSpec(
            num_scalar_prefetch=0,
            grid=(1,),
            in_specs=[_full_spec(a) for a in inputs],
            out_specs=pl.BlockSpec((BS, E), lambda i: (0, 0)),
        ),
        compiler_params=pltpu.CompilerParams(
            dimension_semantics=("arbitrary",)),
    )(*inputs)
    return out[:, :O].reshape(B, S * O)


# ---------------- parameter construction (deterministic) --------------------
def make_positional_encoding(max_len, d_model):
    position = np.arange(max_len, dtype=np.float32)[:, None]
    div_term = np.exp(np.arange(0, d_model, 2, dtype=np.float32)
                      * (-math.log(10000.0) / d_model))
    pe = np.zeros((max_len, d_model), dtype=np.float32)
    pe[:, 0::2] = np.sin(position * div_term)
    pe[:, 1::2] = np.cos(position * div_term)
    return jnp.asarray(pe)


def init_params(key):
    keys = jax.random.split(key, 16)
    n = lambda k, shape, s=0.05: (s * jax.random.normal(k, shape)).astype(jnp.float32)

    pe = make_positional_encoding(S, E)                      # (S, E)
    enc_w = n(keys[0], (E, F))                               # PyTorch Linear layout (out,in)
    enc_b = n(keys[1], (1, E))
    inW = n(keys[2], (NLAYER, 3 * E, E))
    inB = n(keys[3], (NLAYER, 1, 3 * E))
    outW = n(keys[4], (NLAYER, E, E))
    outB = n(keys[5], (NLAYER, 1, E))
    ln1g = jnp.ones((NLAYER, 1, E), jnp.float32)
    ln1b = jnp.zeros((NLAYER, 1, E), jnp.float32)
    l1W = n(keys[6], (NLAYER, E, E))
    l1b = n(keys[7], (NLAYER, 1, E))
    l2W = n(keys[8], (NLAYER, E, E))
    l2b = n(keys[9], (NLAYER, 1, E))
    ln2g = jnp.ones((NLAYER, 1, E), jnp.float32)
    ln2b = jnp.zeros((NLAYER, 1, E), jnp.float32)
    dec_w = n(keys[10], (O, E))
    dec_b = n(keys[11], (1, O))
    return (pe, enc_w, enc_b, inW, inB, outW, outB,
            ln1g, ln1b, l1W, l1b, l2W, l2b, ln2g, ln2b, dec_w, dec_b)


# ---------------- pure-JAX reference (mirrors PyTorch eval forward) ---------
def _layer_norm_ref(x, gamma, beta):
    mu = jnp.mean(x, axis=-1, keepdims=True)
    var = jnp.mean((x - mu) ** 2, axis=-1, keepdims=True)
    return (x - mu) * jax.lax.rsqrt(var + LN_EPS) * gamma + beta


def reference_forward(x, params):
    (pe, enc_w, enc_b, inW, inB, outW, outB,
     ln1g, ln1b, l1W, l1b, l2W, l2b, ln2g, ln2b, dec_w, dec_b) = params
    hp = jax.lax.Precision.HIGHEST
    outs = []
    for b in range(B):
        h = jnp.dot(x[b], enc_w.T, precision=hp) + enc_b
        h = h * math.sqrt(E) + pe
        for l in range(NLAYER):
            qkv = jnp.dot(h, inW[l].T, precision=hp) + inB[l]
            q, k, v = qkv[:, :E], qkv[:, E:2 * E], qkv[:, 2 * E:]
            heads = []
            for hd in range(NHEAD):
                sl = slice(hd * HD, (hd + 1) * HD)
                s_ = jnp.dot(q[:, sl], k[:, sl].T, precision=hp) / math.sqrt(HD)
                p = jax.nn.softmax(s_, axis=-1)
                heads.append(jnp.dot(p, v[:, sl], precision=hp))
            attn = jnp.dot(jnp.concatenate(heads, -1), outW[l].T, precision=hp) + outB[l]
            h = _layer_norm_ref(h + attn, ln1g[l], ln1b[l])
            ff = jnp.maximum(jnp.dot(h, l1W[l].T, precision=hp) + l1b[l], 0.0)
            ff = jnp.dot(ff, l2W[l].T, precision=hp) + l2b[l]
            h = _layer_norm_ref(h + ff, ln2g[l], ln2b[l])
        outs.append(jnp.dot(h, dec_w.T, precision=hp) + dec_b)
    return jnp.stack(outs, 0).reshape(B, S * O)


if __name__ == "__main__":
    key = jax.random.PRNGKey(0)
    kx, kp = jax.random.split(key)
    x = jax.random.normal(kx, (B, S, F), dtype=jnp.float32)
    params = init_params(kp)

    out = attention_forward(x, params)
    out = jax.block_until_ready(out)

    ref = reference_forward(x, params)
    assert out.shape == (B, S * O)
    # bf16 matmul inputs (f32 accumulation) per the perf review -> slightly
    # looser tolerance than the f32-everywhere version.
    np.testing.assert_allclose(np.asarray(out), np.asarray(ref),
                               rtol=2e-2, atol=2e-2)
    print("KERNEL_OK")
</pallas_src>

<mosaic_0001>
module attributes {stable_mosaic.version = 11 : i64} {
  func.func @attention_kernel(%arg0: i32, %arg1: memref<16x32xbf16, #tpu.memory_space<vmem>>, %arg2: memref<16x32xf32, #tpu.memory_space<vmem>>, %arg3: memref<64x16xf32, #tpu.memory_space<vmem>>, %arg4: memref<8x32x32xbf16, #tpu.memory_space<vmem>>, %arg5: memref<15x32xf32, #tpu.memory_space<vmem>>, %arg6: memref<2x32x96xbf16, #tpu.memory_space<vmem>>, %arg7: memref<2x96xf32, #tpu.memory_space<vmem>>, %arg8: memref<16x32xf32, #tpu.memory_space<vmem>>) attributes {dimension_semantics = [#tpu.dimension_semantics<arbitrary>], iteration_bounds = array<i64: 1>, scalar_prefetch = 0 : i64, scratch_operands = 0 : i64, tpu.core_type = #tpu.core_type<tc>, window_params = [{pipeline_mode = #tpu.pipeline_mode<synchronous>, transform_indices = @transform_0, window_bounds = array<i64: 16, 32>}, {pipeline_mode = #tpu.pipeline_mode<synchronous>, transform_indices = @transform_1, window_bounds = array<i64: 16, 32>}, {pipeline_mode = #tpu.pipeline_mode<synchronous>, transform_indices = @transform_2, window_bounds = array<i64: 64, 16>}, {pipeline_mode = #tpu.pipeline_mode<synchronous>, transform_indices = @transform_3, window_bounds = array<i64: 8, 32, 32>}, {pipeline_mode = #tpu.pipeline_mode<synchronous>, transform_indices = @transform_4, window_bounds = array<i64: 15, 32>}, {pipeline_mode = #tpu.pipeline_mode<synchronous>, transform_indices = @transform_5, window_bounds = array<i64: 2, 32, 96>}, {pipeline_mode = #tpu.pipeline_mode<synchronous>, transform_indices = @transform_6, window_bounds = array<i64: 2, 96>}, {pipeline_mode = #tpu.pipeline_mode<synchronous>, transform_indices = @transform_7, window_bounds = array<i64: 16, 32>}]} {
    %c0 = arith.constant 0 : index
    %c0_0 = arith.constant 0 : index
    %0 = vector.load %arg1[%c0, %c0_0] : memref<16x32xbf16, #tpu.memory_space<vmem>>, vector<16x32xbf16>
    %c0_1 = arith.constant 0 : index
    %c0_2 = arith.constant 0 : index
    %c0_3 = arith.constant 0 : index
    %1 = vector.load %arg4[%c0_1, %c0_2, %c0_3] : memref<8x32x32xbf16, #tpu.memory_space<vmem>>, vector<1x32x32xbf16>
    %2 = vector.shape_cast %1 : vector<1x32x32xbf16> to vector<32x32xbf16>
    %cst = arith.constant dense<0.000000e+00> : vector<16x32xf32>
    %3 = tpu.matmul %0, %2, %cst {dimension_numbers = #tpu.dot_dimension_numbers<[1], [0], [0], [1], [0, 0, 1, 1], [], []>} : vector<16x32xbf16>, vector<32x32xbf16>, vector<16x32xf32> -> vector<16x32xf32>
    %c0_4 = arith.constant 0 : index
    %c0_5 = arith.constant 0 : index
    %4 = vector.load %arg2[%c0_4, %c0_5] : memref<16x32xf32, #tpu.memory_space<vmem>>, vector<16x32xf32>
    %5 = arith.addf %3, %4 : vector<16x32xf32>
    %c0_6 = arith.constant 0 : index
    %c0_7 = arith.constant 0 : index
    %6 = vector.load %arg3[%c0_6, %c0_7] : memref<64x16xf32, #tpu.memory_space<vmem>>, vector<64x16xf32>
    %7 = arith.truncf %5 : vector<16x32xf32> to vector<16x32xbf16>
    %c0_8 = arith.constant 0 : index
    %c0_9 = arith.constant 0 : index
    %c0_10 = arith.constant 0 : index
    %8 = vector.load %arg6[%c0_8, %c0_9, %c0_10] : memref<2x32x96xbf16, #tpu.memory_space<vmem>>, vector<1x32x96xbf16>
    %9 = vector.shape_cast %8 : vector<1x32x96xbf16> to vector<32x96xbf16>
    %cst_11 = arith.constant dense<0.000000e+00> : vector<16x96xf32>
    %10 = tpu.matmul %7, %9, %cst_11 {dimension_numbers = #tpu.dot_dimension_numbers<[1], [0], [0], [1], [0, 0, 1, 1], [], []>} : vector<16x32xbf16>, vector<32x96xbf16>, vector<16x96xf32> -> vector<16x96xf32>
    %c0_12 = arith.constant 0 : index
    %c0_13 = arith.constant 0 : index
    %11 = vector.load %arg7[%c0_12, %c0_13] : memref<2x96xf32, #tpu.memory_space<vmem>>, vector<1x96xf32>
    %12 = vector.broadcast %11 : vector<1x96xf32> to vector<16x96xf32>
    %13 = arith.addf %10, %12 : vector<16x96xf32>
    %14 = arith.truncf %13 : vector<16x96xf32> to vector<16x96xbf16>
    %15 = vector.extract_strided_slice %14 {offsets = [0, 0], sizes = [16, 8], strides = [1, 1]} : vector<16x96xbf16> to vector<16x8xbf16>
    %16 = vector.extract_strided_slice %14 {offsets = [0, 32], sizes = [16, 8], strides = [1, 1]} : vector<16x96xbf16> to vector<16x8xbf16>
    %cst_14 = arith.constant dense<0.000000e+00> : vector<16x16xf32>
    %17 = tpu.matmul %15, %16, %cst_14 {dimension_numbers = #tpu.dot_dimension_numbers<[1], [1], [0], [0], [0, 0, 1, 0], [], []>} : vector<16x8xbf16>, vector<16x8xbf16>, vector<16x16xf32> -> vector<16x16xf32>
    %18 = vector.extract_strided_slice %14 {offsets = [0, 8], sizes = [16, 8], strides = [1, 1]} : vector<16x96xbf16> to vector<16x8xbf16>
    %19 = vector.extract_strided_slice %14 {offsets = [0, 40], sizes = [16, 8], strides = [1, 1]} : vector<16x96xbf16> to vector<16x8xbf16>
    %cst_15 = arith.constant dense<0.000000e+00> : vector<16x16xf32>
    %20 = tpu.matmul %18, %19, %cst_15 {dimension_numbers = #tpu.dot_dimension_numbers<[1], [1], [0], [0], [0, 0, 1, 0], [], []>} : vector<16x8xbf16>, vector<16x8xbf16>, vector<16x16xf32> -> vector<16x16xf32>
    %21 = vector.extract_strided_slice %14 {offsets = [0, 16], sizes = [16, 8], strides = [1, 1]} : vector<16x96xbf16> to vector<16x8xbf16>
    %22 = vector.extract_strided_slice %14 {offsets = [0, 48], sizes = [16, 8], strides = [1, 1]} : vector<16x96xbf16> to vector<16x8xbf16>
    %cst_16 = arith.constant dense<0.000000e+00> : vector<16x16xf32>
    %23 = tpu.matmul %21, %22, %cst_16 {dimension_numbers = #tpu.dot_dimension_numbers<[1], [1], [0], [0], [0, 0, 1, 0], [], []>} : vector<16x8xbf16>, vector<16x8xbf16>, vector<16x16xf32> -> vector<16x16xf32>
    %24 = vector.extract_strided_slice %14 {offsets = [0, 24], sizes = [16, 8], strides = [1, 1]} : vector<16x96xbf16> to vector<16x8xbf16>
    %25 = vector.extract_strided_slice %14 {offsets = [0, 56], sizes = [16, 8], strides = [1, 1]} : vector<16x96xbf16> to vector<16x8xbf16>
    %cst_17 = arith.constant dense<0.000000e+00> : vector<16x16xf32>
    %26 = tpu.matmul %24, %25, %cst_17 {dimension_numbers = #tpu.dot_dimension_numbers<[1], [1], [0], [0], [0, 0, 1, 0], [], []>} : vector<16x8xbf16>, vector<16x8xbf16>, vector<16x16xf32> -> vector<16x16xf32>
    %27 = tpu.concatenate %17, %20, %23, %26 in 0 : vector<16x16xf32>, vector<16x16xf32>, vector<16x16xf32>, vector<16x16xf32> -> vector<64x16xf32>
    %28 = arith.addf %27, %6 : vector<64x16xf32>
    %cst_18 = arith.constant dense<0xFF800000> : vector<64xf32>
    %29 = vector.multi_reduction <maximumf>, %28, %cst_18 [1] : vector<64x16xf32> to vector<64xf32>
    %30 = vector.shape_cast %29 : vector<64xf32> to vector<64x1xf32>
    %31 = vector.broadcast %30 : vector<64x1xf32> to vector<64x16xf32>
    %32 = arith.subf %28, %31 : vector<64x16xf32>
    %33 = math.exp %32 : vector<64x16xf32>
    %cst_19 = arith.constant dense<0.000000e+00> : vector<64xf32>
    %34 = vector.multi_reduction <add>, %33, %cst_19 [1] : vector<64x16xf32> to vector<64xf32>
    %35 = vector.shape_cast %34 : vector<64xf32> to vector<64x1xf32>
    %36 = tpu.reciprocal %35 {approx = true} : vector<64x1xf32> -> vector<64x1xf32>
    %37 = vector.broadcast %36 : vector<64x1xf32> to vector<64x16xf32>
    %38 = arith.mulf %33, %37 : vector<64x16xf32>
    %39 = arith.truncf %38 : vector<64x16xf32> to vector<64x16xbf16>
    %40 = vector.extract_strided_slice %14 {offsets = [0, 64], sizes = [16, 8], strides = [1, 1]} : vector<16x96xbf16> to vector<16x8xbf16>
    %41 = vector.extract_strided_slice %39 {offsets = [0, 0], sizes = [16, 16], strides = [1, 1]} : vector<64x16xbf16> to vector<16x16xbf16>
    %cst_20 = arith.constant dense<0.000000e+00> : vector<16x8xf32>
    %42 = tpu.matmul %41, %40, %cst_20 {dimension_numbers = #tpu.dot_dimension_numbers<[1], [0], [0], [1], [0, 0, 1, 1], [], []>} : vector<16x16xbf16>, vector<16x8xbf16>, vector<16x8xf32> -> vector<16x8xf32>
    %43 = vector.extract_strided_slice %14 {offsets = [0, 72], sizes = [16, 8], strides = [1, 1]} : vector<16x96xbf16> to vector<16x8xbf16>
    %44 = vector.extract_strided_slice %39 {offsets = [16, 0], sizes = [16, 16], strides = [1, 1]} : vector<64x16xbf16> to vector<16x16xbf16>
    %cst_21 = arith.constant dense<0.000000e+00> : vector<16x8xf32>
    %45 = tpu.matmul %44, %43, %cst_21 {dimension_numbers = #tpu.dot_dimension_numbers<[1], [0], [0], [1], [0, 0, 1, 1], [], []>} : vector<16x16xbf16>, vector<16x8xbf16>, vector<16x8xf32> -> vector<16x8xf32>
    %46 = vector.extract_strided_slice %14 {offsets = [0, 80], sizes = [16, 8], strides = [1, 1]} : vector<16x96xbf16> to vector<16x8xbf16>
    %47 = vector.extract_strided_slice %39 {offsets = [32, 0], sizes = [16, 16], strides = [1, 1]} : vector<64x16xbf16> to vector<16x16xbf16>
    %cst_22 = arith.constant dense<0.000000e+00> : vector<16x8xf32>
    %48 = tpu.matmul %47, %46, %cst_22 {dimension_numbers = #tpu.dot_dimension_numbers<[1], [0], [0], [1], [0, 0, 1, 1], [], []>} : vector<16x16xbf16>, vector<16x8xbf16>, vector<16x8xf32> -> vector<16x8xf32>
    %49 = vector.extract_strided_slice %14 {offsets = [0, 88], sizes = [16, 8], strides = [1, 1]} : vector<16x96xbf16> to vector<16x8xbf16>
    %50 = vector.extract_strided_slice %39 {offsets = [48, 0], sizes = [16, 16], strides = [1, 1]} : vector<64x16xbf16> to vector<16x16xbf16>
    %cst_23 = arith.constant dense<0.000000e+00> : vector<16x8xf32>
    %51 = tpu.matmul %50, %49, %cst_23 {dimension_numbers = #tpu.dot_dimension_numbers<[1], [0], [0], [1], [0, 0, 1, 1], [], []>} : vector<16x16xbf16>, vector<16x8xbf16>, vector<16x8xf32> -> vector<16x8xf32>
    %52 = tpu.concatenate %42, %45, %48, %51 in 1 : vector<16x8xf32>, vector<16x8xf32>, vector<16x8xf32>, vector<16x8xf32> -> vector<16x32xf32>
    %53 = arith.truncf %52 : vector<16x32xf32> to vector<16x32xbf16>
    %c2 = arith.constant 2 : index
    %c0_24 = arith.constant 0 : index
    %c0_25 = arith.constant 0 : index
    %54 = vector.load %arg4[%c2, %c0_24, %c0_25] : memref<8x32x32xbf16, #tpu.memory_space<vmem>>, vector<1x32x32xbf16>
    %55 = vector.shape_cast %54 : vector<1x32x32xbf16> to vector<32x32xbf16>
    %cst_26 = arith.constant dense<0.000000e+00> : vector<16x32xf32>
    %56 = tpu.matmul %53, %55, %cst_26 {dimension_numbers = #tpu.dot_dimension_numbers<[1], [0], [0], [1], [0, 0, 1, 1], [], []>} : vector<16x32xbf16>, vector<32x32xbf16>, vector<16x32xf32> -> vector<16x32xf32>
    %c0_27 = arith.constant 0 : index
    %c0_28 = arith.constant 0 : index
    %57 = vector.load %arg5[%c0_27, %c0_28] : memref<15x32xf32, #tpu.memory_space<vmem>>, vector<1x32xf32>
    %58 = vector.broadcast %57 : vector<1x32xf32> to vector<16x32xf32>
    %59 = arith.addf %56, %58 : vector<16x32xf32>
    %60 = arith.addf %5, %59 : vector<16x32xf32>
    %c1 = arith.constant 1 : index
    %c0_29 = arith.constant 0 : index
    %61 = vector.load %arg5[%c1, %c0_29] : memref<15x32xf32, #tpu.memory_space<vmem>>, vector<1x32xf32>
    %c2_30 = arith.constant 2 : index
    %c0_31 = arith.constant 0 : index
    %62 = vector.load %arg5[%c2_30, %c0_31] : memref<15x32xf32, #tpu.memory_space<vmem>>, vector<1x32xf32>
    %cst_32 = arith.constant dense<0.000000e+00> : vector<16xf32>
    %63 = vector.multi_reduction <add>, %60, %cst_32 [1] : vector<16x32xf32> to vector<16xf32>
    %64 = vector.shape_cast %63 : vector<16xf32> to vector<16x1xf32>
    %cst_33 = arith.constant 3.200000e+01 : f32
    %65 = vector.broadcast %cst_33 : f32 to vector<16x1xf32>
    %66 = arith.divf %64, %65 : vector<16x1xf32>
    %67 = arith.mulf %60, %60 : vector<16x32xf32>
    %cst_34 = arith.constant dense<0.000000e+00> : vector<16xf32>
    %68 = vector.multi_reduction <add>, %67, %cst_34 [1] : vector<16x32xf32> to vector<16xf32>
    %69 = vector.shape_cast %68 : vector<16xf32> to vector<16x1xf32>
    %cst_35 = arith.constant 3.200000e+01 : f32
    %70 = vector.broadcast %cst_35 : f32 to vector<16x1xf32>
    %71 = arith.divf %69, %70 : vector<16x1xf32>
    %72 = arith.mulf %66, %66 : vector<16x1xf32>
    %73 = arith.subf %71, %72 : vector<16x1xf32>
    %74 = vector.broadcast %66 : vector<16x1xf32> to vector<16x32xf32>
    %75 = arith.subf %60, %74 : vector<16x32xf32>
    %cst_36 = arith.constant 9.99999974E-6 : f32
    %76 = vector.broadcast %cst_36 : f32 to vector<16x1xf32>
    %77 = arith.addf %73, %76 : vector<16x1xf32>
    %78 = math.rsqrt %77 : vector<16x1xf32>
    %79 = vector.broadcast %78 : vector<16x1xf32> to vector<16x32xf32>
    %80 = arith.mulf %75, %79 : vector<16x32xf32>
    %81 = vector.broadcast %61 : vector<1x32xf32> to vector<16x32xf32>
    %82 = arith.mulf %80, %81 : vector<16x32xf32>
    %83 = vector.broadcast %62 : vector<1x32xf32> to vector<16x32xf32>
    %84 = arith.addf %82, %83 : vector<16x32xf32>
    %85 = arith.truncf %84 : vector<16x32xf32> to vector<16x32xbf16>
    %c3 = arith.constant 3 : index
    %c0_37 = arith.constant 0 : index
    %c0_38 = arith.constant 0 : index
    %86 = vector.load %arg4[%c3, %c0_37, %c0_38] : memref<8x32x32xbf16, #tpu.memory_space<vmem>>, vector<1x32x32xbf16>
    %87 = vector.shape_cast %86 : vector<1x32x32xbf16> to vector<32x32xbf16>
    %cst_39 = arith.constant dense<0.000000e+00> : vector<16x32xf32>
    %88 = tpu.matmul %85, %87, %cst_39 {dimension_numbers = #tpu.dot_dimension_numbers<[1], [0], [0], [1], [0, 0, 1, 1], [], []>} : vector<16x32xbf16>, vector<32x32xbf16>, vector<16x32xf32> -> vector<16x32xf32>
    %c3_40 = arith.constant 3 : index
    %c0_41 = arith.constant 0 : index
    %89 = vector.load %arg5[%c3_40, %c0_41] : memref<15x32xf32, #tpu.memory_space<vmem>>, vector<1x32xf32>
    %90 = vector.broadcast %89 : vector<1x32xf32> to vector<16x32xf32>
    %91 = arith.addf %88, %90 : vector<16x32xf32>
    %cst_42 = arith.constant 0.000000e+00 : f32
    %92 = vector.broadcast %cst_42 : f32 to vector<16x32xf32>
    %93 = arith.maximumf %91, %92 : vector<16x32xf32>
    %94 = arith.truncf %93 : vector<16x32xf32> to vector<16x32xbf16>
    %c4 = arith.constant 4 : index
    %c0_43 = arith.constant 0 : index
    %c0_44 = arith.constant 0 : index
    %95 = vector.load %arg4[%c4, %c0_43, %c0_44] : memref<8x32x32xbf16, #tpu.memory_space<vmem>>, vector<1x32x32xbf16>
    %96 = vector.shape_cast %95 : vector<1x32x32xbf16> to vector<32x32xbf16>
    %cst_45 = arith.constant dense<0.000000e+00> : vector<16x32xf32>
    %97 = tpu.matmul %94, %96, %cst_45 {dimension_numbers = #tpu.dot_dimension_numbers<[1], [0], [0], [1], [0, 0, 1, 1], [], []>} : vector<16x32xbf16>, vector<32x32xbf16>, vector<16x32xf32> -> vector<16x32xf32>
    %c4_46 = arith.constant 4 : index
    %c0_47 = arith.constant 0 : index
    %98 = vector.load %arg5[%c4_46, %c0_47] : memref<15x32xf32, #tpu.memory_space<vmem>>, vector<1x32xf32>
    %99 = vector.broadcast %98 : vector<1x32xf32> to vector<16x32xf32>
    %100 = arith.addf %97, %99 : vector<16x32xf32>
    %101 = arith.addf %84, %100 : vector<16x32xf32>
    %c5 = arith.constant 5 : index
    %c0_48 = arith.constant 0 : index
    %102 = vector.load %arg5[%c5, %c0_48] : memref<15x32xf32, #tpu.memory_space<vmem>>, vector<1x32xf32>
    %c6 = arith.constant 6 : index
    %c0_49 = arith.constant 0 : index
    %103 = vector.load %arg5[%c6, %c0_49] : memref<15x32xf32, #tpu.memory_space<vmem>>, vector<1x32xf32>
    %cst_50 = arith.constant dense<0.000000e+00> : vector<16xf32>
    %104 = vector.multi_reduction <add>, %101, %cst_50 [1] : vector<16x32xf32> to vector<16xf32>
    %105 = vector.shape_cast %104 : vector<16xf32> to vector<16x1xf32>
    %cst_51 = arith.constant 3.200000e+01 : f32
    %106 = vector.broadcast %cst_51 : f32 to vector<16x1xf32>
    %107 = arith.divf %105, %106 : vector<16x1xf32>
    %108 = arith.mulf %101, %101 : vector<16x32xf32>
    %cst_52 = arith.constant dense<0.000000e+00> : vector<16xf32>
    %109 = vector.multi_reduction <add>, %108, %cst_52 [1] : vector<16x32xf32> to vector<16xf32>
    %110 = vector.shape_cast %109 : vector<16xf32> to vector<16x1xf32>
    %cst_53 = arith.constant 3.200000e+01 : f32
    %111 = vector.broadcast %cst_53 : f32 to vector<16x1xf32>
    %112 = arith.divf %110, %111 : vector<16x1xf32>
    %113 = arith.mulf %107, %107 : vector<16x1xf32>
    %114 = arith.subf %112, %113 : vector<16x1xf32>
    %115 = vector.broadcast %107 : vector<16x1xf32> to vector<16x32xf32>
    %116 = arith.subf %101, %115 : vector<16x32xf32>
    %cst_54 = arith.constant 9.99999974E-6 : f32
    %117 = vector.broadcast %cst_54 : f32 to vector<16x1xf32>
    %118 = arith.addf %114, %117 : vector<16x1xf32>
    %119 = math.rsqrt %118 : vector<16x1xf32>
    %120 = vector.broadcast %119 : vector<16x1xf32> to vector<16x32xf32>
    %121 = arith.mulf %116, %120 : vector<16x32xf32>
    %122 = vector.broadcast %102 : vector<1x32xf32> to vector<16x32xf32>
    %123 = arith.mulf %121, %122 : vector<16x32xf32>
    %124 = vector.broadcast %103 : vector<1x32xf32> to vector<16x32xf32>
    %125 = arith.addf %123, %124 : vector<16x32xf32>
    %126 = arith.truncf %125 : vector<16x32xf32> to vector<16x32xbf16>
    %c1_55 = arith.constant 1 : index
    %c0_56 = arith.constant 0 : index
    %c0_57 = arith.constant 0 : index
    %127 = vector.load %arg6[%c1_55, %c0_56, %c0_57] : memref<2x32x96xbf16, #tpu.memory_space<vmem>>, vector<1x32x96xbf16>
    %128 = vector.shape_cast %127 : vector<1x32x96xbf16> to vector<32x96xbf16>
    %cst_58 = arith.constant dense<0.000000e+00> : vector<16x96xf32>
    %129 = tpu.matmul %126, %128, %cst_58 {dimension_numbers = #tpu.dot_dimension_numbers<[1], [0], [0], [1], [0, 0, 1, 1], [], []>} : vector<16x32xbf16>, vector<32x96xbf16>, vector<16x96xf32> -> vector<16x96xf32>
    %c1_59 = arith.constant 1 : index
    %c0_60 = arith.constant 0 : index
    %130 = vector.load %arg7[%c1_59, %c0_60] : memref<2x96xf32, #tpu.memory_space<vmem>>, vector<1x96xf32>
    %131 = vector.broadcast %130 : vector<1x96xf32> to vector<16x96xf32>
    %132 = arith.addf %129, %131 : vector<16x96xf32>
    %133 = arith.truncf %132 : vector<16x96xf32> to vector<16x96xbf16>
    %134 = vector.extract_strided_slice %133 {offsets = [0, 0], sizes = [16, 8], strides = [1, 1]} : vector<16x96xbf16> to vector<16x8xbf16>
    %135 = vector.extract_strided_slice %133 {offsets = [0, 32], sizes = [16, 8], strides = [1, 1]} : vector<16x96xbf16> to vector<16x8xbf16>
    %cst_61 = arith.constant dense<0.000000e+00> : vector<16x16xf32>
    %136 = tpu.matmul %134, %135, %cst_61 {dimension_numbers = #tpu.dot_dimension_numbers<[1], [1], [0], [0], [0, 0, 1, 0], [], []>} : vector<16x8xbf16>, vector<16x8xbf16>, vector<16x16xf32> -> vector<16x16xf32>
    %137 = vector.extract_strided_slice %133 {offsets = [0, 8], sizes = [16, 8], strides = [1, 1]} : vector<16x96xbf16> to vector<16x8xbf16>
    %138 = vector.extract_strided_slice %133 {offsets = [0, 40], sizes = [16, 8], strides = [1, 1]} : vector<16x96xbf16> to vector<16x8xbf16>
    %cst_62 = arith.constant dense<0.000000e+00> : vector<16x16xf32>
    %139 = tpu.matmul %137, %138, %cst_62 {dimension_numbers = #tpu.dot_dimension_numbers<[1], [1], [0], [0], [0, 0, 1, 0], [], []>} : vector<16x8xbf16>, vector<16x8xbf16>, vector<16x16xf32> -> vector<16x16xf32>
    %140 = vector.extract_strided_slice %133 {offsets = [0, 16], sizes = [16, 8], strides = [1, 1]} : vector<16x96xbf16> to vector<16x8xbf16>
    %141 = vector.extract_strided_slice %133 {offsets = [0, 48], sizes = [16, 8], strides = [1, 1]} : vector<16x96xbf16> to vector<16x8xbf16>
    %cst_63 = arith.constant dense<0.000000e+00> : vector<16x16xf32>
    %142 = tpu.matmul %140, %141, %cst_63 {dimension_numbers = #tpu.dot_dimension_numbers<[1], [1], [0], [0], [0, 0, 1, 0], [], []>} : vector<16x8xbf16>, vector<16x8xbf16>, vector<16x16xf32> -> vector<16x16xf32>
    %143 = vector.extract_strided_slice %133 {offsets = [0, 24], sizes = [16, 8], strides = [1, 1]} : vector<16x96xbf16> to vector<16x8xbf16>
    %144 = vector.extract_strided_slice %133 {offsets = [0, 56], sizes = [16, 8], strides = [1, 1]} : vector<16x96xbf16> to vector<16x8xbf16>
    %cst_64 = arith.constant dense<0.000000e+00> : vector<16x16xf32>
    %145 = tpu.matmul %143, %144, %cst_64 {dimension_numbers = #tpu.dot_dimension_numbers<[1], [1], [0], [0], [0, 0, 1, 0], [], []>} : vector<16x8xbf16>, vector<16x8xbf16>, vector<16x16xf32> -> vector<16x16xf32>
    %146 = tpu.concatenate %136, %139, %142, %145 in 0 : vector<16x16xf32>, vector<16x16xf32>, vector<16x16xf32>, vector<16x16xf32> -> vector<64x16xf32>
    %147 = arith.addf %146, %6 : vector<64x16xf32>
    %cst_65 = arith.constant dense<0xFF800000> : vector<64xf32>
    %148 = vector.multi_reduction <maximumf>, %147, %cst_65 [1] : vector<64x16xf32> to vector<64xf32>
    %149 = vector.shape_cast %148 : vector<64xf32> to vector<64x1xf32>
    %150 = vector.broadcast %149 : vector<64x1xf32> to vector<64x16xf32>
    %151 = arith.subf %147, %150 : vector<64x16xf32>
    %152 = math.exp %151 : vector<64x16xf32>
    %cst_66 = arith.constant dense<0.000000e+00> : vector<64xf32>
    %153 = vector.multi_reduction <add>, %152, %cst_66 [1] : vector<64x16xf32> to vector<64xf32>
    %154 = vector.shape_cast %153 : vector<64xf32> to vector<64x1xf32>
    %155 = tpu.reciprocal %154 {approx = true} : vector<64x1xf32> -> vector<64x1xf32>
    %156 = vector.broadcast %155 : vector<64x1xf32> to vector<64x16xf32>
    %157 = arith.mulf %152, %156 : vector<64x16xf32>
    %158 = arith.truncf %157 : vector<64x16xf32> to vector<64x16xbf16>
    %159 = vector.extract_strided_slice %133 {offsets = [0, 64], sizes = [16, 8], strides = [1, 1]} : vector<16x96xbf16> to vector<16x8xbf16>
    %160 = vector.extract_strided_slice %158 {offsets = [0, 0], sizes = [16, 16], strides = [1, 1]} : vector<64x16xbf16> to vector<16x16xbf16>
    %cst_67 = arith.constant dense<0.000000e+00> : vector<16x8xf32>
    %161 = tpu.matmul %160, %159, %cst_67 {dimension_numbers = #tpu.dot_dimension_numbers<[1], [0], [0], [1], [0, 0, 1, 1], [], []>} : vector<16x16xbf16>, vector<16x8xbf16>, vector<16x8xf32> -> vector<16x8xf32>
    %162 = vector.extract_strided_slice %133 {offsets = [0, 72], sizes = [16, 8], strides = [1, 1]} : vector<16x96xbf16> to vector<16x8xbf16>
    %163 = vector.extract_strided_slice %158 {offsets = [16, 0], sizes = [16, 16], strides = [1, 1]} : vector<64x16xbf16> to vector<16x16xbf16>
    %cst_68 = arith.constant dense<0.000000e+00> : vector<16x8xf32>
    %164 = tpu.matmul %163, %162, %cst_68 {dimension_numbers = #tpu.dot_dimension_numbers<[1], [0], [0], [1], [0, 0, 1, 1], [], []>} : vector<16x16xbf16>, vector<16x8xbf16>, vector<16x8xf32> -> vector<16x8xf32>
    %165 = vector.extract_strided_slice %133 {offsets = [0, 80], sizes = [16, 8], strides = [1, 1]} : vector<16x96xbf16> to vector<16x8xbf16>
    %166 = vector.extract_strided_slice %158 {offsets = [32, 0], sizes = [16, 16], strides = [1, 1]} : vector<64x16xbf16> to vector<16x16xbf16>
    %cst_69 = arith.constant dense<0.000000e+00> : vector<16x8xf32>
    %167 = tpu.matmul %166, %165, %cst_69 {dimension_numbers = #tpu.dot_dimension_numbers<[1], [0], [0], [1], [0, 0, 1, 1], [], []>} : vector<16x16xbf16>, vector<16x8xbf16>, vector<16x8xf32> -> vector<16x8xf32>
    %168 = vector.extract_strided_slice %133 {offsets = [0, 88], sizes = [16, 8], strides = [1, 1]} : vector<16x96xbf16> to vector<16x8xbf16>
    %169 = vector.extract_strided_slice %158 {offsets = [48, 0], sizes = [16, 16], strides = [1, 1]} : vector<64x16xbf16> to vector<16x16xbf16>
    %cst_70 = arith.constant dense<0.000000e+00> : vector<16x8xf32>
    %170 = tpu.matmul %169, %168, %cst_70 {dimension_numbers = #tpu.dot_dimension_numbers<[1], [0], [0], [1], [0, 0, 1, 1], [], []>} : vector<16x16xbf16>, vector<16x8xbf16>, vector<16x8xf32> -> vector<16x8xf32>
    %171 = tpu.concatenate %161, %164, %167, %170 in 1 : vector<16x8xf32>, vector<16x8xf32>, vector<16x8xf32>, vector<16x8xf32> -> vector<16x32xf32>
    %172 = arith.truncf %171 : vector<16x32xf32> to vector<16x32xbf16>
    %c5_71 = arith.constant 5 : index
    %c0_72 = arith.constant 0 : index
    %c0_73 = arith.constant 0 : index
    %173 = vector.load %arg4[%c5_71, %c0_72, %c0_73] : memref<8x32x32xbf16, #tpu.memory_space<vmem>>, vector<1x32x32xbf16>
    %174 = vector.shape_cast %173 : vector<1x32x32xbf16> to vector<32x32xbf16>
    %cst_74 = arith.constant dense<0.000000e+00> : vector<16x32xf32>
    %175 = tpu.matmul %172, %174, %cst_74 {dimension_numbers = #tpu.dot_dimension_numbers<[1], [0], [0], [1], [0, 0, 1, 1], [], []>} : vector<16x32xbf16>, vector<32x32xbf16>, vector<16x32xf32> -> vector<16x32xf32>
    %c7 = arith.constant 7 : index
    %c0_75 = arith.constant 0 : index
    %176 = vector.load %arg5[%c7, %c0_75] : memref<15x32xf32, #tpu.memory_space<vmem>>, vector<1x32xf32>
    %177 = vector.broadcast %176 : vector<1x32xf32> to vector<16x32xf32>
    %178 = arith.addf %175, %177 : vector<16x32xf32>
    %179 = arith.addf %125, %178 : vector<16x32xf32>
    %c8 = arith.constant 8 : index
    %c0_76 = arith.constant 0 : index
    %180 = vector.load %arg5[%c8, %c0_76] : memref<15x32xf32, #tpu.memory_space<vmem>>, vector<1x32xf32>
    %c9 = arith.constant 9 : index
    %c0_77 = arith.constant 0 : index
    %181 = vector.load %arg5[%c9, %c0_77] : memref<15x32xf32, #tpu.memory_space<vmem>>, vector<1x32xf32>
    %cst_78 = arith.constant dense<0.000000e+00> : vector<16xf32>
    %182 = vector.multi_reduction <add>, %179, %cst_78 [1] : vector<16x32xf32> to vector<16xf32>
    %183 = vector.shape_cast %182 : vector<16xf32> to vector<16x1xf32>
    %cst_79 = arith.constant 3.200000e+01 : f32
    %184 = vector.broadcast %cst_79 : f32 to vector<16x1xf32>
    %185 = arith.divf %183, %184 : vector<16x1xf32>
    %186 = arith.mulf %179, %179 : vector<16x32xf32>
    %cst_80 = arith.constant dense<0.000000e+00> : vector<16xf32>
    %187 = vector.multi_reduction <add>, %186, %cst_80 [1] : vector<16x32xf32> to vector<16xf32>
    %188 = vector.shape_cast %187 : vector<16xf32> to vector<16x1xf32>
    %cst_81 = arith.constant 3.200000e+01 : f32
    %189 = vector.broadcast %cst_81 : f32 to vector<16x1xf32>
    %190 = arith.divf %188, %189 : vector<16x1xf32>
    %191 = arith.mulf %185, %185 : vector<16x1xf32>
    %192 = arith.subf %190, %191 : vector<16x1xf32>
    %193 = vector.broadcast %185 : vector<16x1xf32> to vector<16x32xf32>
    %194 = arith.subf %179, %193 : vector<16x32xf32>
    %cst_82 = arith.constant 9.99999974E-6 : f32
    %195 = vector.broadcast %cst_82 : f32 to vector<16x1xf32>
    %196 = arith.addf %192, %195 : vector<16x1xf32>
    %197 = math.rsqrt %196 : vector<16x1xf32>
    %198 = vector.broadcast %197 : vector<16x1xf32> to vector<16x32xf32>
    %199 = arith.mulf %194, %198 : vector<16x32xf32>
    %200 = vector.broadcast %180 : vector<1x32xf32> to vector<16x32xf32>
    %201 = arith.mulf %199, %200 : vector<16x32xf32>
    %202 = vector.broadcast %181 : vector<1x32xf32> to vector<16x32xf32>
    %203 = arith.addf %201, %202 : vector<16x32xf32>
    %204 = arith.truncf %203 : vector<16x32xf32> to vector<16x32xbf16>
    %c6_83 = arith.constant 6 : index
    %c0_84 = arith.constant 0 : index
    %c0_85 = arith.constant 0 : index
    %205 = vector.load %arg4[%c6_83, %c0_84, %c0_85] : memref<8x32x32xbf16, #tpu.memory_space<vmem>>, vector<1x32x32xbf16>
    %206 = vector.shape_cast %205 : vector<1x32x32xbf16> to vector<32x32xbf16>
    %cst_86 = arith.constant dense<0.000000e+00> : vector<16x32xf32>
    %207 = tpu.matmul %204, %206, %cst_86 {dimension_numbers = #tpu.dot_dimension_numbers<[1], [0], [0], [1], [0, 0, 1, 1], [], []>} : vector<16x32xbf16>, vector<32x32xbf16>, vector<16x32xf32> -> vector<16x32xf32>
    %c10 = arith.constant 10 : index
    %c0_87 = arith.constant 0 : index
    %208 = vector.load %arg5[%c10, %c0_87] : memref<15x32xf32, #tpu.memory_space<vmem>>, vector<1x32xf32>
    %209 = vector.broadcast %208 : vector<1x32xf32> to vector<16x32xf32>
    %210 = arith.addf %207, %209 : vector<16x32xf32>
    %cst_88 = arith.constant 0.000000e+00 : f32
    %211 = vector.broadcast %cst_88 : f32 to vector<16x32xf32>
    %212 = arith.maximumf %210, %211 : vector<16x32xf32>
    %213 = arith.truncf %212 : vector<16x32xf32> to vector<16x32xbf16>
    %c7_89 = arith.constant 7 : index
    %c0_90 = arith.constant 0 : index
    %c0_91 = arith.constant 0 : index
    %214 = vector.load %arg4[%c7_89, %c0_90, %c0_91] : memref<8x32x32xbf16, #tpu.memory_space<vmem>>, vector<1x32x32xbf16>
    %215 = vector.shape_cast %214 : vector<1x32x32xbf16> to vector<32x32xbf16>
    %cst_92 = arith.constant dense<0.000000e+00> : vector<16x32xf32>
    %216 = tpu.matmul %213, %215, %cst_92 {dimension_numbers = #tpu.dot_dimension_numbers<[1], [0], [0], [1], [0, 0, 1, 1], [], []>} : vector<16x32xbf16>, vector<32x32xbf16>, vector<16x32xf32> -> vector<16x32xf32>
    %c11 = arith.constant 11 : index
    %c0_93 = arith.constant 0 : index
    %217 = vector.load %arg5[%c11, %c0_93] : memref<15x32xf32, #tpu.memory_space<vmem>>, vector<1x32xf32>
    %218 = vector.broadcast %217 : vector<1x32xf32> to vector<16x32xf32>
    %219 = arith.addf %216, %218 : vector<16x32xf32>
    %220 = arith.addf %203, %219 : vector<16x32xf32>
    %c12 = arith.constant 12 : index
    %c0_94 = arith.constant 0 : index
    %221 = vector.load %arg5[%c12, %c0_94] : memref<15x32xf32, #tpu.memory_space<vmem>>, vector<1x32xf32>
    %c13 = arith.constant 13 : index
    %c0_95 = arith.constant 0 : index
    %222 = vector.load %arg5[%c13, %c0_95] : memref<15x32xf32, #tpu.memory_space<vmem>>, vector<1x32xf32>
    %cst_96 = arith.constant dense<0.000000e+00> : vector<16xf32>
    %223 = vector.multi_reduction <add>, %220, %cst_96 [1] : vector<16x32xf32> to vector<16xf32>
    %224 = vector.shape_cast %223 : vector<16xf32> to vector<16x1xf32>
    %cst_97 = arith.constant 3.200000e+01 : f32
    %225 = vector.broadcast %cst_97 : f32 to vector<16x1xf32>
    %226 = arith.divf %224, %225 : vector<16x1xf32>
    %227 = arith.mulf %220, %220 : vector<16x32xf32>
    %cst_98 = arith.constant dense<0.000000e+00> : vector<16xf32>
    %228 = vector.multi_reduction <add>, %227, %cst_98 [1] : vector<16x32xf32> to vector<16xf32>
    %229 = vector.shape_cast %228 : vector<16xf32> to vector<16x1xf32>
    %cst_99 = arith.constant 3.200000e+01 : f32
    %230 = vector.broadcast %cst_99 : f32 to vector<16x1xf32>
    %231 = arith.divf %229, %230 : vector<16x1xf32>
    %232 = arith.mulf %226, %226 : vector<16x1xf32>
    %233 = arith.subf %231, %232 : vector<16x1xf32>
    %234 = vector.broadcast %226 : vector<16x1xf32> to vector<16x32xf32>
    %235 = arith.subf %220, %234 : vector<16x32xf32>
    %cst_100 = arith.constant 9.99999974E-6 : f32
    %236 = vector.broadcast %cst_100 : f32 to vector<16x1xf32>
    %237 = arith.addf %233, %236 : vector<16x1xf32>
    %238 = math.rsqrt %237 : vector<16x1xf32>
    %239 = vector.broadcast %238 : vector<16x1xf32> to vector<16x32xf32>
    %240 = arith.mulf %235, %239 : vector<16x32xf32>
    %241 = vector.broadcast %221 : vector<1x32xf32> to vector<16x32xf32>
    %242 = arith.mulf %240, %241 : vector<16x32xf32>
    %243 = vector.broadcast %222 : vector<1x32xf32> to vector<16x32xf32>
    %244 = arith.addf %242, %243 : vector<16x32xf32>
    %245 = arith.truncf %244 : vector<16x32xf32> to vector<16x32xbf16>
    %c1_101 = arith.constant 1 : index
    %c0_102 = arith.constant 0 : index
    %c0_103 = arith.constant 0 : index
    %246 = vector.load %arg4[%c1_101, %c0_102, %c0_103] : memref<8x32x32xbf16, #tpu.memory_space<vmem>>, vector<1x32x32xbf16>
    %247 = vector.shape_cast %246 : vector<1x32x32xbf16> to vector<32x32xbf16>
    %cst_104 = arith.constant dense<0.000000e+00> : vector<16x32xf32>
    %248 = tpu.matmul %245, %247, %cst_104 {dimension_numbers = #tpu.dot_dimension_numbers<[1], [0], [0], [1], [0, 0, 1, 1], [], []>} : vector<16x32xbf16>, vector<32x32xbf16>, vector<16x32xf32> -> vector<16x32xf32>
    %c14 = arith.constant 14 : index
    %c0_105 = arith.constant 0 : index
    %249 = vector.load %arg5[%c14, %c0_105] : memref<15x32xf32, #tpu.memory_space<vmem>>, vector<1x32xf32>
    %250 = vector.broadcast %249 : vector<1x32xf32> to vector<16x32xf32>
    %251 = arith.addf %248, %250 : vector<16x32xf32>
    %c0_106 = arith.constant 0 : index
    %c0_107 = arith.constant 0 : index
    %252 = vector.load %arg8[%c0_106, %c0_107] : memref<16x32xf32, #tpu.memory_space<vmem>>, vector<16x32xf32>
    tpu.vector_store %arg8[%c0_106, %c0_107], %251 {strides = array<i32>} : memref<16x32xf32, #tpu.memory_space<vmem>>, vector<16x32xf32>,
    return
  }
  func.func @transform_0(%arg0: i32) -> (i32, i32) {
    %c0_i32 = arith.constant 0 : i32
    %c0_i32_0 = arith.constant 0 : i32
    %c0_i32_1 = arith.constant 0 : i32
    return %c0_i32, %c0_i32_0 : i32, i32
  }
  func.func @transform_1(%arg0: i32) -> (i32, i32) {
    %c0_i32 = arith.constant 0 : i32
    %c0_i32_0 = arith.constant 0 : i32
    %c0_i32_1 = arith.constant 0 : i32
    return %c0_i32, %c0_i32_0 : i32, i32
  }
  func.func @transform_2(%arg0: i32) -> (i32, i32) {
    %c0_i32 = arith.constant 0 : i32
    %c0_i32_0 = arith.constant 0 : i32
    %c0_i32_1 = arith.constant 0 : i32
    return %c0_i32, %c0_i32_0 : i32, i32
  }
  func.func @transform_3(%arg0: i32) -> (i32, i32, i32) {
    %c0_i32 = arith.constant 0 : i32
    %c0_i32_0 = arith.constant 0 : i32
    %c0_i32_1 = arith.constant 0 : i32
    %c0_i32_2 = arith.constant 0 : i32
    return %c0_i32, %c0_i32_0, %c0_i32_1 : i32, i32, i32
  }
  func.func @transform_4(%arg0: i32) -> (i32, i32) {
    %c0_i32 = arith.constant 0 : i32
    %c0_i32_0 = arith.constant 0 : i32
    %c0_i32_1 = arith.constant 0 : i32
    return %c0_i32, %c0_i32_0 : i32, i32
  }
  func.func @transform_5(%arg0: i32) -> (i32, i32, i32) {
    %c0_i32 = arith.constant 0 : i32
    %c0_i32_0 = arith.constant 0 : i32
    %c0_i32_1 = arith.constant 0 : i32
    %c0_i32_2 = arith.constant 0 : i32
    return %c0_i32, %c0_i32_0, %c0_i32_1 : i32, i32, i32
  }
  func.func @transform_6(%arg0: i32) -> (i32, i32) {
    %c0_i32 = arith.constant 0 : i32
    %c0_i32_0 = arith.constant 0 : i32
    %c0_i32_1 = arith.constant 0 : i32
    return %c0_i32, %c0_i32_0 : i32, i32
  }
  func.func @transform_7(%arg0: i32) -> (i32, i32) {
    %c0_i32 = arith.constant 0 : i32
    %c0_i32_0 = arith.constant 0 : i32
    %c0_i32_1 = arith.constant 0 : i32
    return %c0_i32, %c0_i32_0 : i32, i32
  }
}

</mosaic_0001>

<llo_original>
// kernel: tpu_custom_call.1
$region0: #{tpu_custom_call.1}
  #allocation0 [shape = 'u32[]', space=smem, size = 0x4, offset = 0x4, fixed_abs, tag = 'smem constant byte address 0x4 - core index']
  #allocation1 [shape = 'u32[72,128]{1,0:T(1,128)}', space=vmem, size = 0x9000, scoped, tag = 'internal scratch']
  %s0 = inlined_call_operand.vmem [shape: bf16[16,32], index: 0, kind: input, shape index: {}]
  %s1 = inlined_call_operand.vmem [shape: f32[16,32], index: 1, kind: input, shape index: {}]
  %s2 = inlined_call_operand.vmem [shape: f32[64,16], index: 2, kind: input, shape index: {}]
  %s3 = inlined_call_operand.hbm [shape: bf16[8,32,32], index: 3, kind: input, shape index: {}]
  %s4 = inlined_call_operand.vmem [shape: f32[15,32], index: 4, kind: input, shape index: {}]
  %s5 = inlined_call_operand.vmem [shape: bf16[2,32,96], index: 5, kind: input, shape index: {}]
  %s6 = inlined_call_operand.vmem [shape: f32[2,96], index: 6, kind: input, shape index: {}]
  %s7 = inlined_call_operand.hbm [shape: f32[16,32], index: 7, kind: output, shape index: {}]
  %s8 = sld [smem:[#allocation0]]
  $region42: #{tpu_custom_call.1} parent=0
    _
  %s10 = ssub.s32 1, %s8
  %s11 = scalar_select 0, %s10, %s8
  $region1: #{tpu_custom_call.1} parent=0
    #allocation2 [shape = 'u8[65536]{0}', space=vmem, size = 0x10000, scoped, tag = 'input window, operand 3, single buffered']
    #allocation3 [shape = 's32[1]{0}', space=sflag, size = 0x4, scoped, tag = 'scoped memory for tpu_custom_call.1']
    #allocation4 [shape = 's32[1]{0}', space=sflag, size = 0x4, scoped, tag = 'scoped memory for tpu_custom_call.1']
    #allocation5 [shape = 'u8[8192]{0}', space=vmem, size = 0x2000, scoped, tag = 'output window, operand 0, single buffered']
    %12 = vsyncpa [#allocation3], 0
    %13 = vsyncpa [#allocation4], 0
    // Predicated region
    $region2: #{tpu_custom_call.1} parent=1 // pred_check
      _
    $region3: #{tpu_custom_call.1} parent=1 // pred_check_branch
      %15 = sbr.rel (0) target = $region5
    $region4: #{tpu_custom_call.1} parent=1 // pred_region
      _
    $region5: #{tpu_custom_call.1} parent=1 // pred_fallthru
      _
    // Predicated region
    $region6: #{tpu_custom_call.1} parent=1 // pred_check
      _
    $region7: #{tpu_custom_call.1} parent=1 // pred_check_branch
      %17 = sbr.rel (0) target = $region9
    $region8: #{tpu_custom_call.1} parent=1 // pred_region
      _
    $region9: #{tpu_custom_call.1} parent=1 // pred_fallthru
      _
    // Predicated region
    $region10: #{tpu_custom_call.1} parent=1 // pred_check
      _
    $region11: #{tpu_custom_call.1} parent=1 // pred_check_branch
      %19 = sbr.rel (0) target = $region13
    $region12: #{tpu_custom_call.1} parent=1 // pred_region
      _
    $region13: #{tpu_custom_call.1} parent=1 // pred_fallthru
      _
    // Predicated region
    $region14: #{tpu_custom_call.1} parent=1 // pred_check
      _
    $region15: #{tpu_custom_call.1} parent=1 // pred_check_branch
      %21 = sbr.rel (0) target = $region17
    $region16: #{tpu_custom_call.1} parent=1 // pred_region
      %23 = vsyncadd [#allocation3], 0
      %s24 = sshll.u32 %s3, 4
      %s25 = int_to_ptr.hbm [resolvable:$true] %s24
      %s26 = sshll.u32 [#allocation2], 4
      %s27 = int_to_ptr.vmem [resolvable:$true] %s26
      %32 = dma.hbm_to_vmem [thread:$0]  %s25, 2048, %s27, [#allocation3], 64, 64, 4
    $region17: #{tpu_custom_call.1} parent=1 // pred_fallthru
      _
    // Predicated region
    $region18: #{tpu_custom_call.1} parent=1 // pred_check
      _
    $region19: #{tpu_custom_call.1} parent=1 // pred_check_branch
      %34 = sbr.rel (0) target = $region21
    $region20: #{tpu_custom_call.1} parent=1 // pred_region
      _
    $region21: #{tpu_custom_call.1} parent=1 // pred_fallthru
      _
    // Predicated region
    $region22: #{tpu_custom_call.1} parent=1 // pred_check
      _
    $region23: #{tpu_custom_call.1} parent=1 // pred_check_branch
      %36 = sbr.rel (0) target = $region25
    $region24: #{tpu_custom_call.1} parent=1 // pred_region
      _
    $region25: #{tpu_custom_call.1} parent=1 // pred_fallthru
      _
    // Predicated region
    $region26: #{tpu_custom_call.1} parent=1 // pred_check
      _
    $region27: #{tpu_custom_call.1} parent=1 // pred_check_branch
      %38 = sbr.rel (0) target = $region29
    $region28: #{tpu_custom_call.1} parent=1 // pred_region
      _
    $region29: #{tpu_custom_call.1} parent=1 // pred_fallthru
      _
    // Predicated region
    $region30: #{tpu_custom_call.1} parent=1 // pred_check
      _
    $region31: #{tpu_custom_call.1} parent=1 // pred_check_branch
      %40 = sbr.rel (0) target = $region33
    $region32: #{tpu_custom_call.1} parent=1 // pred_region
      %42 = dma.done [#allocation3], 2048
    $region33: #{tpu_custom_call.1} parent=1 // pred_fallthru
      _
    %v44 = vld [vmem:[%s0] sm:$0xf]
    %v45 = vld [vmem:[%s0 + $0x4] sm:$0xf]
    %v46 = vld [vmem:[#allocation2] sm:$0xf]
    %v47 = vld [vmem:[#allocation2 + $0x4] sm:$0xf]
    %v48 = vld [vmem:[#allocation2 + $0x8] sm:$0xf]
    %v49 = vld [vmem:[#allocation2 + $0xc] sm:$0xf]
    %v50 = vld [vmem:[%s1] sm:$0xff]
    %v51 = vld [vmem:[%s1 + $0x8] sm:$0xff]
    %v54 = vunpack.c.l.b16 %v44
    %v55 = vunpack.c.l.b16 %v45
    %v56 = vpack.c.b16 %v55, %v54
    %v61 = vunpack.c.l.b16 %v46
    %v62 = vunpack.c.l.b16 %v47
    %v63 = vunpack.c.l.b16 %v48
    %v64 = vunpack.c.l.b16 %v49
    %v65 = vpack.c.b16 %v62, %v61
    %v66 = vpack.c.b16 %v64, %v63
    %vm69 = vcmask 261120
    %v71 = vsel %vm69, %v56, 0
    %73 = vmatpush.bf16.msra.mxu0 0
    %74 = vmatpush.bf16.msra.mxu0 0
    %75 = vmatpush.bf16.msra.mxu0 0
    %76 = vmatpush.bf16.msra.mxu0 0
    %77 = vmatpush.bf16.msra.mxu0 0
    %78 = vmatpush.bf16.msra.mxu0 0
    %79 = vmatpush.bf16.msra.mxu0 %v66
    %80 = vmatpush.bf16.msra.mxu0 %v65
    %81 = vmatmul.bf16.gmra.mxu0 %v71
    %v82 = vpop.f32.mrf.mxu0
    %v83 = vadd.f32 %v50, %v82
    %v84 = vpop.f32.mrf.mxu0
    %v85 = vadd.f32 %v51, %v84
    %86 = vdwg.mxu0
    %v87 = vld [vmem:[%s2] sm:$0xff]
    %v88 = vld [vmem:[%s2 + $0x8] sm:$0xff]
    %v89 = vld [vmem:[%s2 + $0x10] sm:$0xff]
    %v90 = vld [vmem:[%s2 + $0x18] sm:$0xff]
    %v91 = vld [vmem:[%s2 + $0x20] sm:$0xff]
    %v92 = vld [vmem:[%s2 + $0x28] sm:$0xff]
    %v93 = vld [vmem:[%s2 + $0x30] sm:$0xff]
    %v94 = vld [vmem:[%s2 + $0x38] sm:$0xff]
    %v95 = vpack.c.bf16 %v85, %v83
    %v96 = vld [vmem:[%s5] sm:$0xf]
    %v97 = vld [vmem:[%s5 + $0x4] sm:$0xf]
    %v98 = vld [vmem:[%s5 + $0x8] sm:$0xf]
    %v99 = vld [vmem:[%s5 + $0xc] sm:$0xf]
    %v100 = vld [vmem:[%s6] sm:$0x1]
    %v101 = vperm.slane %v100, 0
    %v106 = vunpack.c.l.b16 %v96
    %v107 = vunpack.c.l.b16 %v97
    %v108 = vunpack.c.l.b16 %v98
    %v109 = vunpack.c.l.b16 %v99
    %v110 = vpack.c.b16 %v107, %v106
    %v111 = vpack.c.b16 %v109, %v108
    %v115 = vsel %vm69, %v95, 0
    %117 = vmatpush.bf16.msra.mxu0 0
    %118 = vmatpush.bf16.msra.mxu0 0
    %119 = vmatpush.bf16.msra.mxu0 0
    %120 = vmatpush.bf16.msra.mxu0 0
    %121 = vmatpush.bf16.msra.mxu0 0
    %122 = vmatpush.bf16.msra.mxu0 0
    %123 = vmatpush.bf16.msra.mxu0 %v111
    %124 = vmatpush.bf16.msra.mxu0 %v110
    %125 = vmatmul.bf16.gmra.mxu0 %v115
    %v126 = vpop.f32.mrf.mxu0
    %v127 = vadd.f32 %v101, %v126
    %v128 = vpop.f32.mrf.mxu0
    %v129 = vadd.f32 %v101, %v128
    %130 = vdwg.mxu0
    %v131 = vpack.c.bf16 %v127, %v127
    %v132 = vpack.c.bf16 %v129, %v129
    %v135 = vunpack.c.l.b16 %v131
    %v136 = vunpack.c.l.b16 %v132
    %v137 = vpack.c.b16 %v136, %v135
    %138 = vrot.lane.b32.xlu0 %v137, 96
    %v139 = vpop.permute.xlu0 %138
    %vm140 = vcmask 64512
    %v142 = vsel %vm140, %v137, 0
    %v145 = vsel %vm140, %v139, 0
    %147 = vmatpush.bf16.xpose.msra.mxu0 0
    %148 = vmatpush.bf16.xpose.msra.mxu0 0
    %149 = vmatpush.bf16.xpose.msra.mxu0 0
    %150 = vmatpush.bf16.xpose.msra.mxu0 0
    %151 = vmatpush.bf16.xpose.msra.mxu0 0
    %152 = vmatpush.bf16.xpose.msra.mxu0 0
    %153 = vmatpush.bf16.xpose.msra.mxu0 0
    %154 = vmatpush.bf16.xpose.msra.mxu0 %v145
    %155 = vmatmul.bf16.gmra.mxu0 %v142
    %v156 = vpop.f32.mrf.mxu0
    %v157 = vadd.f32 0.0, %v156
    %v158 = vpop.f32.mrf.mxu0
    %v159 = vadd.f32 0.0, %v158
    %160 = vdwg.mxu0
    %161 = vrot.lane.b32.xlu0 %v137, 120
    %v162 = vpop.permute.xlu0 %161
    %163 = vrot.lane.b32.xlu0 %v137, 88
    %v164 = vpop.permute.xlu0 %163
    %v166 = vsel %vm140, %v162, 0
    %v169 = vsel %vm140, %v164, 0
    %171 = vmatpush.bf16.xpose.msra.mxu0 0
    %172 = vmatpush.bf16.xpose.msra.mxu0 0
    %173 = vmatpush.bf16.xpose.msra.mxu0 0
    %174 = vmatpush.bf16.xpose.msra.mxu0 0
    %175 = vmatpush.bf16.xpose.msra.mxu0 0
    %176 = vmatpush.bf16.xpose.msra.mxu0 0
    %177 = vmatpush.bf16.xpose.msra.mxu0 0
    %178 = vmatpush.bf16.xpose.msra.mxu0 %v169
    %179 = vmatmul.bf16.gmra.mxu0 %v166
    %v180 = vpop.f32.mrf.mxu0
    %v181 = vadd.f32 0.0, %v180
    %v182 = vpop.f32.mrf.mxu0
    %v183 = vadd.f32 0.0, %v182
    %184 = vdwg.mxu0
    %185 = vrot.lane.b32.xlu0 %v137, 112
    %v186 = vpop.permute.xlu0 %185
    %187 = vrot.lane.b32.xlu0 %v137, 80
    %v188 = vpop.permute.xlu0 %187
    %v190 = vsel %vm140, %v186, 0
    %v193 = vsel %vm140, %v188, 0
    %195 = vmatpush.bf16.xpose.msra.mxu0 0
    %196 = vmatpush.bf16.xpose.msra.mxu0 0
    %197 = vmatpush.bf16.xpose.msra.mxu0 0
    %198 = vmatpush.bf16.xpose.msra.mxu0 0
    %199 = vmatpush.bf16.xpose.msra.mxu0 0
    %200 = vmatpush.bf16.xpose.msra.mxu0 0
    %201 = vmatpush.bf16.xpose.msra.mxu0 0
    %202 = vmatpush.bf16.xpose.msra.mxu0 %v193
    %203 = vmatmul.bf16.gmra.mxu0 %v190
    %v204 = vpop.f32.mrf.mxu0
    %v205 = vadd.f32 0.0, %v204
    %v206 = vpop.f32.mrf.mxu0
    %v207 = vadd.f32 0.0, %v206
    %208 = vdwg.mxu0
    %209 = vrot.lane.b32.xlu0 %v137, 104
    %v210 = vpop.permute.xlu0 %209
    %211 = vrot.lane.b32.xlu0 %v137, 72
    %v212 = vpop.permute.xlu0 %211
    %v214 = vsel %vm140, %v210, 0
    %v217 = vsel %vm140, %v212, 0
    %219 = vmatpush.bf16.xpose.msra.mxu0 0
    %220 = vmatpush.bf16.xpose.msra.mxu0 0
    %221 = vmatpush.bf16.xpose.msra.mxu0 0
    %222 = vmatpush.bf16.xpose.msra.mxu0 0
    %223 = vmatpush.bf16.xpose.msra.mxu0 0
    %224 = vmatpush.bf16.xpose.msra.mxu0 0
    %225 = vmatpush.bf16.xpose.msra.mxu0 0
    %226 = vmatpush.bf16.xpose.msra.mxu0 %v217
    %227 = vmatmul.bf16.gmra.mxu0 %v214
    %v228 = vpop.f32.mrf.mxu0
    %v229 = vadd.f32 0.0, %v228
    %v230 = vpop.f32.mrf.mxu0
    %v231 = vadd.f32 0.0, %v230
    %232 = vdwg.mxu0
    %v233 = vadd.f32 %v157, %v87
    %v234 = vadd.f32 %v159, %v88
    %v235 = vadd.f32 %v181, %v89
    %v236 = vadd.f32 %v183, %v90
    %v237 = vadd.f32 %v205, %v91
    %v238 = vadd.f32 %v207, %v92
    %v239 = vadd.f32 %v229, %v93
    %v240 = vadd.f32 %v231, %v94
    %vm241 = vcmask 130048
    %v242 = vsel %vm241, %v233, -inf
    %243 = vmax.xlane.f32.xlu0 %v242
    %v244 = vpop.xlane.xlu0 %243
    %v245 = vsel %vm241, %v234, -inf
    %246 = vmax.xlane.f32.xlu0 %v245
    %v247 = vpop.xlane.xlu0 %246
    %v248 = vsel %vm241, %v235, -inf
    %249 = vmax.xlane.f32.xlu0 %v248
    %v250 = vpop.xlane.xlu0 %249
    %v251 = vsel %vm241, %v236, -inf
    %252 = vmax.xlane.f32.xlu0 %v251
    %v253 = vpop.xlane.xlu0 %252
    %v254 = vsel %vm241, %v237, -inf
    %255 = vmax.xlane.f32.xlu0 %v254
    %v256 = vpop.xlane.xlu0 %255
    %v257 = vsel %vm241, %v238, -inf
    %258 = vmax.xlane.f32.xlu0 %v257
    %v259 = vpop.xlane.xlu0 %258
    %v260 = vsel %vm241, %v239, -inf
    %261 = vmax.xlane.f32.xlu0 %v260
    %v262 = vpop.xlane.xlu0 %261
    %v263 = vsel %vm241, %v240, -inf
    %264 = vmax.xlane.f32.xlu0 %v263
    %v265 = vpop.xlane.xlu0 %264
    %v266 = vsub.f32 %v233, %v244
    %v267 = vsub.f32 %v234, %v247
    %v268 = vsub.f32 %v235, %v250
    %v269 = vsub.f32 %v236, %v253
    %v270 = vsub.f32 %v237, %v256
    %v271 = vsub.f32 %v238, %v259
    %v272 = vsub.f32 %v239, %v262
    %v273 = vsub.f32 %v240, %v265
    %v274 = vmul.f32 %v266, 1.442695
    %v275 = vpow.pop %v274
    %v276 = vmul.f32 %v267, 1.442695
    %v277 = vpow.pop %v276
    %v278 = vmul.f32 %v268, 1.442695
    %v279 = vpow.pop %v278
    %v280 = vmul.f32 %v269, 1.442695
    %v281 = vpow.pop %v280
    %v282 = vmul.f32 %v270, 1.442695
    %v283 = vpow.pop %v282
    %v284 = vmul.f32 %v271, 1.442695
    %v285 = vpow.pop %v284
    %v286 = vmul.f32 %v272, 1.442695
    %v287 = vpow.pop %v286
    %v288 = vmul.f32 %v273, 1.442695
    %v289 = vpow.pop %v288
    %v290 = vsel %vm241, %v275, 0.0
    %291 = vadd.xlane.f32.xlu0 %v290
    %v292 = vpop.xlane.xlu0 %291
    %v293 = vsel %vm241, %v277, 0.0
    %294 = vadd.xlane.f32.xlu0 %v293
    %v295 = vpop.xlane.xlu0 %294
    %v296 = vsel %vm241, %v279, 0.0
    %297 = vadd.xlane.f32.xlu0 %v296
    %v298 = vpop.xlane.xlu0 %297
    %v299 = vsel %vm241, %v281, 0.0
    %300 = vadd.xlane.f32.xlu0 %v299
    %v301 = vpop.xlane.xlu0 %300
    %v302 = vsel %vm241, %v283, 0.0
    %303 = vadd.xlane.f32.xlu0 %v302
    %v304 = vpop.xlane.xlu0 %303
    %v305 = vsel %vm241, %v285, 0.0
    %306 = vadd.xlane.f32.xlu0 %v305
    %v307 = vpop.xlane.xlu0 %306
    %v308 = vsel %vm241, %v287, 0.0
    %309 = vadd.xlane.f32.xlu0 %v308
    %v310 = vpop.xlane.xlu0 %309
    %v311 = vsel %vm241, %v289, 0.0
    %312 = vadd.xlane.f32.xlu0 %v311
    %v313 = vpop.xlane.xlu0 %312
    %v314 = vrcp.pop %v292
    %v315 = vrcp.pop %v295
    %v316 = vrcp.pop %v298
    %v317 = vrcp.pop %v301
    %v318 = vrcp.pop %v304
    %v319 = vrcp.pop %v307
    %v320 = vrcp.pop %v310
    %v321 = vrcp.pop %v313
    %v322 = vmul.f32 %v275, %v314
    %v323 = vmul.f32 %v277, %v315
    %v324 = vmul.f32 %v279, %v316
    %v325 = vmul.f32 %v281, %v317
    %v326 = vmul.f32 %v283, %v318
    %v327 = vmul.f32 %v285, %v319
    %v328 = vmul.f32 %v287, %v320
    %v329 = vmul.f32 %v289, %v321
    %v330 = vpack.c.bf16 %v322, %v322
    %v331 = vpack.c.bf16 %v323, %v323
    %v332 = vpack.c.bf16 %v324, %v324
    %v333 = vpack.c.bf16 %v325, %v325
    %v334 = vpack.c.bf16 %v326, %v326
    %v335 = vpack.c.bf16 %v327, %v327
    %v336 = vpack.c.bf16 %v328, %v328
    %v337 = vpack.c.bf16 %v329, %v329
    %v340 = vunpack.c.l.b16 %v330
    %v341 = vunpack.c.l.b16 %v331
    %v342 = vpack.c.b16 %v341, %v340
    %343 = vrot.lane.b32.xlu0 %v137, 64
    %v344 = vpop.permute.xlu0 %343
    %v347 = vsel %vm241, %v342, 0
    %349 = vmatpush.bf16.msra.mxu0 0
    %350 = vmatpush.bf16.msra.mxu0 0
    %351 = vmatpush.bf16.msra.mxu0 0
    %352 = vmatpush.bf16.msra.mxu0 0
    %353 = vmatpush.bf16.msra.mxu0 0
    %354 = vmatpush.bf16.msra.mxu0 0
    %355 = vmatpush.bf16.msra.mxu0 0
    %356 = vmatpush.bf16.msra.mxu0 %v344
    %357 = vmatmul.bf16.gmra.mxu0 %v347
    %v358 = vpop.f32.mrf.mxu0
    %v359 = vadd.f32 0.0, %v358
    %v360 = vpop.f32.mrf.mxu0
    %v361 = vadd.f32 0.0, %v360
    %362 = vdwg.mxu0
    %v365 = vunpack.c.l.b16 %v332
    %v366 = vunpack.c.l.b16 %v333
    %v367 = vpack.c.b16 %v366, %v365
    %368 = vrot.lane.b32.xlu0 %v137, 56
    %v369 = vpop.permute.xlu0 %368
    %v372 = vsel %vm241, %v367, 0
    %374 = vmatpush.bf16.msra.mxu0 0
    %375 = vmatpush.bf16.msra.mxu0 0
    %376 = vmatpush.bf16.msra.mxu0 0
    %377 = vmatpush.bf16.msra.mxu0 0
    %378 = vmatpush.bf16.msra.mxu0 0
    %379 = vmatpush.bf16.msra.mxu0 0
    %380 = vmatpush.bf16.msra.mxu0 0
    %381 = vmatpush.bf16.msra.mxu0 %v369
    %382 = vmatmul.bf16.gmra.mxu0 %v372
    %v383 = vpop.f32.mrf.mxu0
    %v384 = vadd.f32 0.0, %v383
    %v385 = vpop.f32.mrf.mxu0
    %v386 = vadd.f32 0.0, %v385
    %387 = vdwg.mxu0
    %v390 = vunpack.c.l.b16 %v334
    %v391 = vunpack.c.l.b16 %v335
    %v392 = vpack.c.b16 %v391, %v390
    %393 = vrot.lane.b32.xlu0 %v137, 48
    %v394 = vpop.permute.xlu0 %393
    %v397 = vsel %vm241, %v392, 0
    %399 = vmatpush.bf16.msra.mxu0 0
    %400 = vmatpush.bf16.msra.mxu0 0
    %401 = vmatpush.bf16.msra.mxu0 0
    %402 = vmatpush.bf16.msra.mxu0 0
    %403 = vmatpush.bf16.msra.mxu0 0
    %404 = vmatpush.bf16.msra.mxu0 0
    %405 = vmatpush.bf16.msra.mxu0 0
    %406 = vmatpush.bf16.msra.mxu0 %v394
    %407 = vmatmul.bf16.gmra.mxu0 %v397
    %v408 = vpop.f32.mrf.mxu0
    %v409 = vadd.f32 0.0, %v408
    %v410 = vpop.f32.mrf.mxu0
    %v411 = vadd.f32 0.0, %v410
    %412 = vdwg.mxu0
    %v415 = vunpack.c.l.b16 %v336
    %v416 = vunpack.c.l.b16 %v337
    %v417 = vpack.c.b16 %v416, %v415
    %418 = vrot.lane.b32.xlu0 %v137, 40
    %v419 = vpop.permute.xlu0 %418
    %v422 = vsel %vm241, %v417, 0
    %424 = vmatpush.bf16.msra.mxu0 0
    %425 = vmatpush.bf16.msra.mxu0 0
    %426 = vmatpush.bf16.msra.mxu0 0
    %427 = vmatpush.bf16.msra.mxu0 0
    %428 = vmatpush.bf16.msra.mxu0 0
    %429 = vmatpush.bf16.msra.mxu0 0
    %430 = vmatpush.bf16.msra.mxu0 0
    %431 = vmatpush.bf16.msra.mxu0 %v419
    %432 = vmatmul.bf16.gmra.mxu0 %v422
    %v433 = vpop.f32.mrf.mxu0
    %v434 = vadd.f32 0.0, %v433
    %v435 = vpop.f32.mrf.mxu0
    %v436 = vadd.f32 0.0, %v435
    %437 = vdwg.mxu0
    %440 = vrot.lane.b32.xlu0 %v384, 8
    %v441 = vpop.permute.xlu0 %440
    %442 = vrot.lane.b32.xlu0 %v386, 8
    %v443 = vpop.permute.xlu0 %442
    %448 = vrot.lane.b32.xlu0 %v409, 16
    %v449 = vpop.permute.xlu0 %448
    %450 = vrot.lane.b32.xlu0 %v411, 16
    %v451 = vpop.permute.xlu0 %450
    %456 = vrot.lane.b32.xlu0 %v434, 24
    %v457 = vpop.permute.xlu0 %456
    %458 = vrot.lane.b32.xlu0 %v436, 24
    %v459 = vpop.permute.xlu0 %458
    %v462 = vsel %vm140, %v359, %v441
    %v463 = vsel %vm140, %v361, %v443
    %v464 = vsel %vm241, %v462, %v449
    %v465 = vsel %vm241, %v463, %v451
    %vm466 = vcmask 195584
    %v467 = vsel %vm466, %v464, %v457
    %v468 = vsel %vm466, %v465, %v459
    %v469 = vpack.c.bf16 %v468, %v467
    %s470 = scalar_lea.vmem [#allocation2], 32
    %v471 = vld [vmem:[%s470] sm:$0xf]
    %v472 = vld [vmem:[%s470 + $0x4] sm:$0xf]
    %v473 = vld [vmem:[%s470 + $0x8] sm:$0xf]
    %v474 = vld [vmem:[%s470 + $0xc] sm:$0xf]
    %v475 = vld [vmem:[%s4] sm:$0x1]
    %v476 = vperm.slane %v475, 0
    %v481 = vunpack.c.l.b16 %v471
    %v482 = vunpack.c.l.b16 %v472
    %v483 = vunpack.c.l.b16 %v473
    %v484 = vunpack.c.l.b16 %v474
    %v485 = vpack.c.b16 %v482, %v481
    %v486 = vpack.c.b16 %v484, %v483
    %v490 = vsel %vm69, %v469, 0
    %492 = vmatpush.bf16.msra.mxu0 0
    %493 = vmatpush.bf16.msra.mxu0 0
    %494 = vmatpush.bf16.msra.mxu0 0
    %495 = vmatpush.bf16.msra.mxu0 0
    %496 = vmatpush.bf16.msra.mxu0 0
    %497 = vmatpush.bf16.msra.mxu0 0
    %498 = vmatpush.bf16.msra.mxu0 %v486
    %499 = vmatpush.bf16.msra.mxu0 %v485
    %500 = vmatmul.bf16.gmra.mxu0 %v490
    %v501 = vpop.f32.mrf.mxu0
    %v502 = vadd.f32 %v476, %v501
    %v503 = vpop.f32.mrf.mxu0
    %v504 = vadd.f32 %v476, %v503
    %505 = vdwg.mxu0
    %v506 = vadd.f32 %v83, %v502
    %v507 = vadd.f32 %v85, %v504
    %v508 = vld [vmem:[%s4 + $0x1] sm:$0x1]
    %v509 = vld [vmem:[%s4 + $0x2] sm:$0x1]
    %v510 = vsel %vm69, %v506, 0.0
    %511 = vadd.xlane.f32.xlu0 %v510
    %v512 = vpop.xlane.xlu0 %511
    %v513 = vsel %vm69, %v507, 0.0
    %514 = vadd.xlane.f32.xlu0 %v513
    %v515 = vpop.xlane.xlu0 %514
    %v516 = vrcp.pop 32.0
    %v517 = vmul.f32 32.0, %v516
    %v518 = vsub.f32 1.0, %v517
    %v519 = vmul.f32 %v516, %v518
    %v520 = vadd.f32 %v516, %v519
    %vm521 = vweird.f32 %v516
    %v522 = vsel %vm521, %v516, %v520
    %v523 = vmul.f32 %v512, %v522
    %v524 = vmul.f32 %v515, %v522
    %v525 = vmul.f32 %v506, %v506
    %v526 = vmul.f32 %v507, %v507
    %v527 = vsel %vm69, %v525, 0.0
    %528 = vadd.xlane.f32.xlu0 %v527
    %v529 = vpop.xlane.xlu0 %528
    %v530 = vsel %vm69, %v526, 0.0
    %531 = vadd.xlane.f32.xlu0 %v530
    %v532 = vpop.xlane.xlu0 %531
    %v533 = vmul.f32 %v529, %v522
    %v534 = vmul.f32 %v532, %v522
    %v535 = vmul.f32 %v523, %v523
    %v536 = vmul.f32 %v524, %v524
    %v537 = vsub.f32 %v533, %v535
    %v538 = vsub.f32 %v534, %v536
    %v539 = vsub.f32 %v506, %v523
    %v540 = vsub.f32 %v507, %v524
    %v541 = vadd.f32 %v537, 1e-05
    %v542 = vadd.f32 %v538, 1e-05
    %v543 = vrsqrt.pop %v541
    %v544 = vmul.f32 %v543, %v541
    %v545 = vmul.f32 %v544, %v543
    %v546 = vmul.f32 0.5, %v545
    %v547 = vsub.f32 1.5, %v546
    %v548 = vmul.f32 %v543, %v547
    %vm549 = vweird.f32 %v541
    %vm550 = vweird.f32 %v543
    %vm551 = vmor %vm549, %vm550
    %v552 = vsel %vm551, %v543, %v548
    %v553 = vrsqrt.pop %v542
    %v554 = vmul.f32 %v553, %v542
    %v555 = vmul.f32 %v554, %v553
    %v556 = vmul.f32 0.5, %v555
    %v557 = vsub.f32 1.5, %v556
    %v558 = vmul.f32 %v553, %v557
    %vm559 = vweird.f32 %v542
    %vm560 = vweird.f32 %v553
    %vm561 = vmor %vm559, %vm560
    %v562 = vsel %vm561, %v553, %v558
    %v563 = vmul.f32 %v539, %v552
    %v564 = vmul.f32 %v540, %v562
    %v565 = vperm.slane %v508, 0
    %v566 = vmul.f32 %v563, %v565
    %v567 = vmul.f32 %v564, %v565
    %v568 = vperm.slane %v509, 0
    %v569 = vadd.f32 %v566, %v568
    %v570 = vadd.f32 %v567, %v568
    %v571 = vpack.c.bf16 %v570, %v569
    %s572 = scalar_lea.vmem [#allocation2], 48
    %v573 = vld [vmem:[%s572] sm:$0xf]
    %v574 = vld [vmem:[%s572 + $0x4] sm:$0xf]
    %v575 = vld [vmem:[%s572 + $0x8] sm:$0xf]
    %v576 = vld [vmem:[%s572 + $0xc] sm:$0xf]
    %v577 = vld [vmem:[%s4 + $0x3] sm:$0x1]
    %v578 = vperm.slane %v577, 0
    %v583 = vunpack.c.l.b16 %v573
    %v584 = vunpack.c.l.b16 %v574
    %v585 = vunpack.c.l.b16 %v575
    %v586 = vunpack.c.l.b16 %v576
    %v587 = vpack.c.b16 %v584, %v583
    %v588 = vpack.c.b16 %v586, %v585
    %v592 = vsel %vm69, %v571, 0
    %594 = vmatpush.bf16.msra.mxu0 0
    %595 = vmatpush.bf16.msra.mxu0 0
    %596 = vmatpush.bf16.msra.mxu0 0
    %597 = vmatpush.bf16.msra.mxu0 0
    %598 = vmatpush.bf16.msra.mxu0 0
    %599 = vmatpush.bf16.msra.mxu0 0
    %600 = vmatpush.bf16.msra.mxu0 %v588
    %601 = vmatpush.bf16.msra.mxu0 %v587
    %602 = vmatmul.bf16.gmra.mxu0 %v592
    %v603 = vpop.f32.mrf.mxu0
    %v604 = vadd.f32 %v578, %v603
    %v605 = vpop.f32.mrf.mxu0
    %v606 = vadd.f32 %v578, %v605
    %607 = vdwg.mxu0
    %v608 = vmax.f32 %v604, 0.0
    %v609 = vmax.f32 %v606, 0.0
    %v610 = vpack.c.bf16 %v609, %v608
    %s611 = scalar_lea.vmem [#allocation2], 64
    %v612 = vld [vmem:[%s611] sm:$0xf]
    %v613 = vld [vmem:[%s611 + $0x4] sm:$0xf]
    %v614 = vld [vmem:[%s611 + $0x8] sm:$0xf]
    %v615 = vld [vmem:[%s611 + $0xc] sm:$0xf]
    %v616 = vld [vmem:[%s4 + $0x4] sm:$0x1]
    %v617 = vperm.slane %v616, 0
    %v622 = vunpack.c.l.b16 %v612
    %v623 = vunpack.c.l.b16 %v613
    %v624 = vunpack.c.l.b16 %v614
    %v625 = vunpack.c.l.b16 %v615
    %v626 = vpack.c.b16 %v623, %v622
    %v627 = vpack.c.b16 %v625, %v624
    %v631 = vsel %vm69, %v610, 0
    %633 = vmatpush.bf16.msra.mxu0 0
    %634 = vmatpush.bf16.msra.mxu0 0
    %635 = vmatpush.bf16.msra.mxu0 0
    %636 = vmatpush.bf16.msra.mxu0 0
    %637 = vmatpush.bf16.msra.mxu0 0
    %638 = vmatpush.bf16.msra.mxu0 0
    %639 = vmatpush.bf16.msra.mxu0 %v627
    %640 = vmatpush.bf16.msra.mxu0 %v626
    %641 = vmatmul.bf16.gmra.mxu0 %v631
    %v642 = vpop.f32.mrf.mxu0
    %v643 = vadd.f32 %v617, %v642
    %v644 = vpop.f32.mrf.mxu0
    %v645 = vadd.f32 %v617, %v644
    %646 = vdwg.mxu0
    %v647 = vadd.f32 %v569, %v643
    %v648 = vadd.f32 %v570, %v645
    %v649 = vld [vmem:[%s4 + $0x5] sm:$0x1]
    %v650 = vld [vmem:[%s4 + $0x6] sm:$0x1]
    %v651 = vsel %vm69, %v647, 0.0
    %652 = vadd.xlane.f32.xlu0 %v651
    %v653 = vpop.xlane.xlu0 %652
    %v654 = vsel %vm69, %v648, 0.0
    %655 = vadd.xlane.f32.xlu0 %v654
    %v656 = vpop.xlane.xlu0 %655
    %v657 = vmul.f32 %v653, %v522
    %v658 = vmul.f32 %v656, %v522
    %v659 = vmul.f32 %v647, %v647
    %v660 = vmul.f32 %v648, %v648
    %v661 = vsel %vm69, %v659, 0.0
    %662 = vadd.xlane.f32.xlu0 %v661
    %v663 = vpop.xlane.xlu0 %662
    %v664 = vsel %vm69, %v660, 0.0
    %665 = vadd.xlane.f32.xlu0 %v664
    %v666 = vpop.xlane.xlu0 %665
    %v667 = vmul.f32 %v663, %v522
    %v668 = vmul.f32 %v666, %v522
    %v669 = vmul.f32 %v657, %v657
    %v670 = vmul.f32 %v658, %v658
    %v671 = vsub.f32 %v667, %v669
    %v672 = vsub.f32 %v668, %v670
    %v673 = vsub.f32 %v647, %v657
    %v674 = vsub.f32 %v648, %v658
    %v675 = vadd.f32 %v671, 1e-05
    %v676 = vadd.f32 %v672, 1e-05
    %v677 = vrsqrt.pop %v675
    %v678 = vmul.f32 %v677, %v675
    %v679 = vmul.f32 %v678, %v677
    %v680 = vmul.f32 0.5, %v679
    %v681 = vsub.f32 1.5, %v680
    %v682 = vmul.f32 %v677, %v681
    %vm683 = vweird.f32 %v675
    %vm684 = vweird.f32 %v677
    %vm685 = vmor %vm683, %vm684
    %v686 = vsel %vm685, %v677, %v682
    %v687 = vrsqrt.pop %v676
    %v688 = vmul.f32 %v687, %v676
    %v689 = vmul.f32 %v688, %v687
    %v690 = vmul.f32 0.5, %v689
    %v691 = vsub.f32 1.5, %v690
    %v692 = vmul.f32 %v687, %v691
    %vm693 = vweird.f32 %v676
    %vm694 = vweird.f32 %v687
    %vm695 = vmor %vm693, %vm694
    %v696 = vsel %vm695, %v687, %v692
    %v697 = vmul.f32 %v673, %v686
    %v698 = vmul.f32 %v674, %v696
    %v699 = vperm.slane %v649, 0
    %v700 = vmul.f32 %v697, %v699
    %v701 = vmul.f32 %v698, %v699
    %v702 = vperm.slane %v650, 0
    %v703 = vadd.f32 %v700, %v702
    %v704 = vadd.f32 %v701, %v702
    %v705 = vpack.c.bf16 %v704, %v703
    %s706 = scalar_lea.vmem %s5, 16
    %v707 = vld [vmem:[%s706] sm:$0xf]
    %v708 = vld [vmem:[%s706 + $0x4] sm:$0xf]
    %v709 = vld [vmem:[%s706 + $0x8] sm:$0xf]
    %v710 = vld [vmem:[%s706 + $0xc] sm:$0xf]
    %v711 = vld [vmem:[%s6 + $0x1] sm:$0x1]
    %v712 = vperm.slane %v711, 0
    %v717 = vunpack.c.l.b16 %v707
    %v718 = vunpack.c.l.b16 %v708
    %v719 = vunpack.c.l.b16 %v709
    %v720 = vunpack.c.l.b16 %v710
    %v721 = vpack.c.b16 %v718, %v717
    %v722 = vpack.c.b16 %v720, %v719
    %v726 = vsel %vm69, %v705, 0
    %728 = vmatpush.bf16.msra.mxu0 0
    %729 = vmatpush.bf16.msra.mxu0 0
    %730 = vmatpush.bf16.msra.mxu0 0
    %731 = vmatpush.bf16.msra.mxu0 0
    %732 = vmatpush.bf16.msra.mxu0 0
    %733 = vmatpush.bf16.msra.mxu0 0
    %734 = vmatpush.bf16.msra.mxu0 %v722
    %735 = vmatpush.bf16.msra.mxu0 %v721
    %736 = vmatmul.bf16.gmra.mxu0 %v726
    %v737 = vpop.f32.mrf.mxu0
    %v738 = vadd.f32 %v712, %v737
    %v739 = vpop.f32.mrf.mxu0
    %v740 = vadd.f32 %v712, %v739
    %741 = vdwg.mxu0
    %v742 = vpack.c.bf16 %v738, %v738
    %v743 = vpack.c.bf16 %v740, %v740
    %v746 = vunpack.c.l.b16 %v742
    %v747 = vunpack.c.l.b16 %v743
    %v748 = vpack.c.b16 %v747, %v746
    %749 = vrot.lane.b32.xlu0 %v748, 96
    %v750 = vpop.permute.xlu0 %749
    %v752 = vsel %vm140, %v748, 0
    %v755 = vsel %vm140, %v750, 0
    %757 = vmatpush.bf16.xpose.msra.mxu0 0
    %758 = vmatpush.bf16.xpose.msra.mxu0 0
    %759 = vmatpush.bf16.xpose.msra.mxu0 0
    %760 = vmatpush.bf16.xpose.msra.mxu0 0
    %761 = vmatpush.bf16.xpose.msra.mxu0 0
    %762 = vmatpush.bf16.xpose.msra.mxu0 0
    %763 = vmatpush.bf16.xpose.msra.mxu0 0
    %764 = vmatpush.bf16.xpose.msra.mxu0 %v755
    %765 = vmatmul.bf16.gmra.mxu0 %v752
    %v766 = vpop.f32.mrf.mxu0
    %v767 = vadd.f32 0.0, %v766
    %v768 = vpop.f32.mrf.mxu0
    %v769 = vadd.f32 0.0, %v768
    %770 = vdwg.mxu0
    %771 = vrot.lane.b32.xlu0 %v748, 120
    %v772 = vpop.permute.xlu0 %771
    %773 = vrot.lane.b32.xlu0 %v748, 88
    %v774 = vpop.permute.xlu0 %773
    %v776 = vsel %vm140, %v772, 0
    %v779 = vsel %vm140, %v774, 0
    %781 = vmatpush.bf16.xpose.msra.mxu0 0
    %782 = vmatpush.bf16.xpose.msra.mxu0 0
    %783 = vmatpush.bf16.xpose.msra.mxu0 0
    %784 = vmatpush.bf16.xpose.msra.mxu0 0
    %785 = vmatpush.bf16.xpose.msra.mxu0 0
    %786 = vmatpush.bf16.xpose.msra.mxu0 0
    %787 = vmatpush.bf16.xpose.msra.mxu0 0
    %788 = vmatpush.bf16.xpose.msra.mxu0 %v779
    %789 = vmatmul.bf16.gmra.mxu0 %v776
    %v790 = vpop.f32.mrf.mxu0
    %v791 = vadd.f32 0.0, %v790
    %v792 = vpop.f32.mrf.mxu0
    %v793 = vadd.f32 0.0, %v792
    %794 = vdwg.mxu0
    %795 = vrot.lane.b32.xlu0 %v748, 112
    %v796 = vpop.permute.xlu0 %795
    %797 = vrot.lane.b32.xlu0 %v748, 80
    %v798 = vpop.permute.xlu0 %797
    %v800 = vsel %vm140, %v796, 0
    %v803 = vsel %vm140, %v798, 0
    %805 = vmatpush.bf16.xpose.msra.mxu0 0
    %806 = vmatpush.bf16.xpose.msra.mxu0 0
    %807 = vmatpush.bf16.xpose.msra.mxu0 0
    %808 = vmatpush.bf16.xpose.msra.mxu0 0
    %809 = vmatpush.bf16.xpose.msra.mxu0 0
    %810 = vmatpush.bf16.xpose.msra.mxu0 0
    %811 = vmatpush.bf16.xpose.msra.mxu0 0
    %812 = vmatpush.bf16.xpose.msra.mxu0 %v803
    %813 = vmatmul.bf16.gmra.mxu0 %v800
    %v814 = vpop.f32.mrf.mxu0
    %v815 = vadd.f32 0.0, %v814
    %v816 = vpop.f32.mrf.mxu0
    %v817 = vadd.f32 0.0, %v816
    %818 = vdwg.mxu0
    %819 = vrot.lane.b32.xlu0 %v748, 104
    %v820 = vpop.permute.xlu0 %819
    %821 = vrot.lane.b32.xlu0 %v748, 72
    %v822 = vpop.permute.xlu0 %821
    %v824 = vsel %vm140, %v820, 0
    %v827 = vsel %vm140, %v822, 0
    %829 = vmatpush.bf16.xpose.msra.mxu0 0
    %830 = vmatpush.bf16.xpose.msra.mxu0 0
    %831 = vmatpush.bf16.xpose.msra.mxu0 0
    %832 = vmatpush.bf16.xpose.msra.mxu0 0
    %833 = vmatpush.bf16.xpose.msra.mxu0 0
    %834 = vmatpush.bf16.xpose.msra.mxu0 0
    %835 = vmatpush.bf16.xpose.msra.mxu0 0
    %836 = vmatpush.bf16.xpose.msra.mxu0 %v827
    %837 = vmatmul.bf16.gmra.mxu0 %v824
    %v838 = vpop.f32.mrf.mxu0
    %v839 = vadd.f32 0.0, %v838
    %v840 = vpop.f32.mrf.mxu0
    %v841 = vadd.f32 0.0, %v840
    %842 = vdwg.mxu0
    %v843 = vadd.f32 %v767, %v87
    %v844 = vadd.f32 %v769, %v88
    %v845 = vadd.f32 %v791, %v89
    %v846 = vadd.f32 %v793, %v90
    %v847 = vadd.f32 %v815, %v91
    %v848 = vadd.f32 %v817, %v92
    %v849 = vadd.f32 %v839, %v93
    %v850 = vadd.f32 %v841, %v94
    %v851 = vsel %vm241, %v843, -inf
    %852 = vmax.xlane.f32.xlu0 %v851
    %v853 = vpop.xlane.xlu0 %852
    %v854 = vsel %vm241, %v844, -inf
    %855 = vmax.xlane.f32.xlu0 %v854
    %v856 = vpop.xlane.xlu0 %855
    %v857 = vsel %vm241, %v845, -inf
    %858 = vmax.xlane.f32.xlu0 %v857
    %v859 = vpop.xlane.xlu0 %858
    %v860 = vsel %vm241, %v846, -inf
    %861 = vmax.xlane.f32.xlu0 %v860
    %v862 = vpop.xlane.xlu0 %861
    %v863 = vsel %vm241, %v847, -inf
    %864 = vmax.xlane.f32.xlu0 %v863
    %v865 = vpop.xlane.xlu0 %864
    %v866 = vsel %vm241, %v848, -inf
    %867 = vmax.xlane.f32.xlu0 %v866
    %v868 = vpop.xlane.xlu0 %867
    %v869 = vsel %vm241, %v849, -inf
    %870 = vmax.xlane.f32.xlu0 %v869
    %v871 = vpop.xlane.xlu0 %870
    %v872 = vsel %vm241, %v850, -inf
    %873 = vmax.xlane.f32.xlu0 %v872
    %v874 = vpop.xlane.xlu0 %873
    %v875 = vsub.f32 %v843, %v853
    %v876 = vsub.f32 %v844, %v856
    %v877 = vsub.f32 %v845, %v859
    %v878 = vsub.f32 %v846, %v862
    %v879 = vsub.f32 %v847, %v865
    %v880 = vsub.f32 %v848, %v868
    %v881 = vsub.f32 %v849, %v871
    %v882 = vsub.f32 %v850, %v874
    %v883 = vmul.f32 %v875, 1.442695
    %v884 = vpow.pop %v883
    %v885 = vmul.f32 %v876, 1.442695
    %v886 = vpow.pop %v885
    %v887 = vmul.f32 %v877, 1.442695
    %v888 = vpow.pop %v887
    %v889 = vmul.f32 %v878, 1.442695
    %v890 = vpow.pop %v889
    %v891 = vmul.f32 %v879, 1.442695
    %v892 = vpow.pop %v891
    %v893 = vmul.f32 %v880, 1.442695
    %v894 = vpow.pop %v893
    %v895 = vmul.f32 %v881, 1.442695
    %v896 = vpow.pop %v895
    %v897 = vmul.f32 %v882, 1.442695
    %v898 = vpow.pop %v897
    %v899 = vsel %vm241, %v884, 0.0
    %900 = vadd.xlane.f32.xlu0 %v899
    %v901 = vpop.xlane.xlu0 %900
    %v902 = vsel %vm241, %v886, 0.0
    %903 = vadd.xlane.f32.xlu0 %v902
    %v904 = vpop.xlane.xlu0 %903
    %v905 = vsel %vm241, %v888, 0.0
    %906 = vadd.xlane.f32.xlu0 %v905
    %v907 = vpop.xlane.xlu0 %906
    %v908 = vsel %vm241, %v890, 0.0
    %909 = vadd.xlane.f32.xlu0 %v908
    %v910 = vpop.xlane.xlu0 %909
    %v911 = vsel %vm241, %v892, 0.0
    %912 = vadd.xlane.f32.xlu0 %v911
    %v913 = vpop.xlane.xlu0 %912
    %v914 = vsel %vm241, %v894, 0.0
    %915 = vadd.xlane.f32.xlu0 %v914
    %v916 = vpop.xlane.xlu0 %915
    %v917 = vsel %vm241, %v896, 0.0
    %918 = vadd.xlane.f32.xlu0 %v917
    %v919 = vpop.xlane.xlu0 %918
    %v920 = vsel %vm241, %v898, 0.0
    %921 = vadd.xlane.f32.xlu0 %v920
    %v922 = vpop.xlane.xlu0 %921
    %v923 = vrcp.pop %v901
    %v924 = vrcp.pop %v904
    %v925 = vrcp.pop %v907
    %v926 = vrcp.pop %v910
    %v927 = vrcp.pop %v913
    %v928 = vrcp.pop %v916
    %v929 = vrcp.pop %v919
    %v930 = vrcp.pop %v922
    %v931 = vmul.f32 %v884, %v923
    %v932 = vmul.f32 %v886, %v924
    %v933 = vmul.f32 %v888, %v925
    %v934 = vmul.f32 %v890, %v926
    %v935 = vmul.f32 %v892, %v927
    %v936 = vmul.f32 %v894, %v928
    %v937 = vmul.f32 %v896, %v929
    %v938 = vmul.f32 %v898, %v930
    %v939 = vpack.c.bf16 %v931, %v931
    %v940 = vpack.c.bf16 %v932, %v932
    %v941 = vpack.c.bf16 %v933, %v933
    %v942 = vpack.c.bf16 %v934, %v934
    %v943 = vpack.c.bf16 %v935, %v935
    %v944 = vpack.c.bf16 %v936, %v936
    %v945 = vpack.c.bf16 %v937, %v937
    %v946 = vpack.c.bf16 %v938, %v938
    %v949 = vunpack.c.l.b16 %v939
    %v950 = vunpack.c.l.b16 %v940
    %v951 = vpack.c.b16 %v950, %v949
    %952 = vrot.lane.b32.xlu0 %v748, 64
    %v953 = vpop.permute.xlu0 %952
    %v956 = vsel %vm241, %v951, 0
    %958 = vmatpush.bf16.msra.mxu0 0
    %959 = vmatpush.bf16.msra.mxu0 0
    %960 = vmatpush.bf16.msra.mxu0 0
    %961 = vmatpush.bf16.msra.mxu0 0
    %962 = vmatpush.bf16.msra.mxu0 0
    %963 = vmatpush.bf16.msra.mxu0 0
    %964 = vmatpush.bf16.msra.mxu0 0
    %965 = vmatpush.bf16.msra.mxu0 %v953
    %966 = vmatmul.bf16.gmra.mxu0 %v956
    %v967 = vpop.f32.mrf.mxu0
    %v968 = vadd.f32 0.0, %v967
    %v969 = vpop.f32.mrf.mxu0
    %v970 = vadd.f32 0.0, %v969
    %971 = vdwg.mxu0
    %v974 = vunpack.c.l.b16 %v941
    %v975 = vunpack.c.l.b16 %v942
    %v976 = vpack.c.b16 %v975, %v974
    %977 = vrot.lane.b32.xlu0 %v748, 56
    %v978 = vpop.permute.xlu0 %977
    %v981 = vsel %vm241, %v976, 0
    %983 = vmatpush.bf16.msra.mxu0 0
    %984 = vmatpush.bf16.msra.mxu0 0
    %985 = vmatpush.bf16.msra.mxu0 0
    %986 = vmatpush.bf16.msra.mxu0 0
    %987 = vmatpush.bf16.msra.mxu0 0
    %988 = vmatpush.bf16.msra.mxu0 0
    %989 = vmatpush.bf16.msra.mxu0 0
    %990 = vmatpush.bf16.msra.mxu0 %v978
    %991 = vmatmul.bf16.gmra.mxu0 %v981
    %v992 = vpop.f32.mrf.mxu0
    %v993 = vadd.f32 0.0, %v992
    %v994 = vpop.f32.mrf.mxu0
    %v995 = vadd.f32 0.0, %v994
    %996 = vdwg.mxu0
    %v999 = vunpack.c.l.b16 %v943
    %v1000 = vunpack.c.l.b16 %v944
    %v1001 = vpack.c.b16 %v1000, %v999
    %1002 = vrot.lane.b32.xlu0 %v748, 48
    %v1003 = vpop.permute.xlu0 %1002
    %v1006 = vsel %vm241, %v1001, 0
    %1008 = vmatpush.bf16.msra.mxu0 0
    %1009 = vmatpush.bf16.msra.mxu0 0
    %1010 = vmatpush.bf16.msra.mxu0 0
    %1011 = vmatpush.bf16.msra.mxu0 0
    %1012 = vmatpush.bf16.msra.mxu0 0
    %1013 = vmatpush.bf16.msra.mxu0 0
    %1014 = vmatpush.bf16.msra.mxu0 0
    %1015 = vmatpush.bf16.msra.mxu0 %v1003
    %1016 = vmatmul.bf16.gmra.mxu0 %v1006
    %v1017 = vpop.f32.mrf.mxu0
    %v1018 = vadd.f32 0.0, %v1017
    %v1019 = vpop.f32.mrf.mxu0
    %v1020 = vadd.f32 0.0, %v1019
    %1021 = vdwg.mxu0
    %v1024 = vunpack.c.l.b16 %v945
    %v1025 = vunpack.c.l.b16 %v946
    %v1026 = vpack.c.b16 %v1025, %v1024
    %1027 = vrot.lane.b32.xlu0 %v748, 40
    %v1028 = vpop.permute.xlu0 %1027
    %v1031 = vsel %vm241, %v1026, 0
    %1033 = vmatpush.bf16.msra.mxu0 0
    %1034 = vmatpush.bf16.msra.mxu0 0
    %1035 = vmatpush.bf16.msra.mxu0 0
    %1036 = vmatpush.bf16.msra.mxu0 0
    %1037 = vmatpush.bf16.msra.mxu0 0
    %1038 = vmatpush.bf16.msra.mxu0 0
    %1039 = vmatpush.bf16.msra.mxu0 0
    %1040 = vmatpush.bf16.msra.mxu0 %v1028
    %1041 = vmatmul.bf16.gmra.mxu0 %v1031
    %v1042 = vpop.f32.mrf.mxu0
    %v1043 = vadd.f32 0.0, %v1042
    %v1044 = vpop.f32.mrf.mxu0
    %v1045 = vadd.f32 0.0, %v1044
    %1046 = vdwg.mxu0
    %1049 = vrot.lane.b32.xlu0 %v993, 8
    %v1050 = vpop.permute.xlu0 %1049
    %1051 = vrot.lane.b32.xlu0 %v995, 8
    %v1052 = vpop.permute.xlu0 %1051
    %1057 = vrot.lane.b32.xlu0 %v1018, 16
    %v1058 = vpop.permute.xlu0 %1057
    %1059 = vrot.lane.b32.xlu0 %v1020, 16
    %v1060 = vpop.permute.xlu0 %1059
    %1065 = vrot.lane.b32.xlu0 %v1043, 24
    %v1066 = vpop.permute.xlu0 %1065
    %1067 = vrot.lane.b32.xlu0 %v1045, 24
    %v1068 = vpop.permute.xlu0 %1067
    %v1071 = vsel %vm140, %v968, %v1050
    %v1072 = vsel %vm140, %v970, %v1052
    %v1073 = vsel %vm241, %v1071, %v1058
    %v1074 = vsel %vm241, %v1072, %v1060
    %v1075 = vsel %vm466, %v1073, %v1066
    %v1076 = vsel %vm466, %v1074, %v1068
    %v1077 = vpack.c.bf16 %v1076, %v1075
    %s1078 = scalar_lea.vmem [#allocation2], 80
    %v1079 = vld [vmem:[%s1078] sm:$0xf]
    %v1080 = vld [vmem:[%s1078 + $0x4] sm:$0xf]
    %v1081 = vld [vmem:[%s1078 + $0x8] sm:$0xf]
    %v1082 = vld [vmem:[%s1078 + $0xc] sm:$0xf]
    %v1083 = vld [vmem:[%s4 + $0x7] sm:$0x1]
    %v1084 = vperm.slane %v1083, 0
    %v1089 = vunpack.c.l.b16 %v1079
    %v1090 = vunpack.c.l.b16 %v1080
    %v1091 = vunpack.c.l.b16 %v1081
    %v1092 = vunpack.c.l.b16 %v1082
    %v1093 = vpack.c.b16 %v1090, %v1089
    %v1094 = vpack.c.b16 %v1092, %v1091
    %v1098 = vsel %vm69, %v1077, 0
    %1100 = vmatpush.bf16.msra.mxu0 0
    %1101 = vmatpush.bf16.msra.mxu0 0
    %1102 = vmatpush.bf16.msra.mxu0 0
    %1103 = vmatpush.bf16.msra.mxu0 0
    %1104 = vmatpush.bf16.msra.mxu0 0
    %1105 = vmatpush.bf16.msra.mxu0 0
    %1106 = vmatpush.bf16.msra.mxu0 %v1094
    %1107 = vmatpush.bf16.msra.mxu0 %v1093
    %1108 = vmatmul.bf16.gmra.mxu0 %v1098
    %v1109 = vpop.f32.mrf.mxu0
    %v1110 = vadd.f32 %v1084, %v1109
    %v1111 = vpop.f32.mrf.mxu0
    %v1112 = vadd.f32 %v1084, %v1111
    %1113 = vdwg.mxu0
    %v1114 = vadd.f32 %v703, %v1110
    %v1115 = vadd.f32 %v704, %v1112
    %v1116 = vld [vmem:[%s4 + $0x8] sm:$0x1]
    %v1117 = vld [vmem:[%s4 + $0x9] sm:$0x1]
    %v1118 = vsel %vm69, %v1114, 0.0
    %1119 = vadd.xlane.f32.xlu0 %v1118
    %v1120 = vpop.xlane.xlu0 %1119
    %v1121 = vsel %vm69, %v1115, 0.0
    %1122 = vadd.xlane.f32.xlu0 %v1121
    %v1123 = vpop.xlane.xlu0 %1122
    %v1124 = vmul.f32 %v1120, %v522
    %v1125 = vmul.f32 %v1123, %v522
    %v1126 = vmul.f32 %v1114, %v1114
    %v1127 = vmul.f32 %v1115, %v1115
    %v1128 = vsel %vm69, %v1126, 0.0
    %1129 = vadd.xlane.f32.xlu0 %v1128
    %v1130 = vpop.xlane.xlu0 %1129
    %v1131 = vsel %vm69, %v1127, 0.0
    %1132 = vadd.xlane.f32.xlu0 %v1131
    %v1133 = vpop.xlane.xlu0 %1132
    %v1134 = vmul.f32 %v1130, %v522
    %v1135 = vmul.f32 %v1133, %v522
    %v1136 = vmul.f32 %v1124, %v1124
    %v1137 = vmul.f32 %v1125, %v1125
    %v1138 = vsub.f32 %v1134, %v1136
    %v1139 = vsub.f32 %v1135, %v1137
    %v1140 = vsub.f32 %v1114, %v1124
    %v1141 = vsub.f32 %v1115, %v1125
    %v1142 = vadd.f32 %v1138, 1e-05
    %v1143 = vadd.f32 %v1139, 1e-05
    %v1144 = vrsqrt.pop %v1142
    %v1145 = vmul.f32 %v1144, %v1142
    %v1146 = vmul.f32 %v1145, %v1144
    %v1147 = vmul.f32 0.5, %v1146
    %v1148 = vsub.f32 1.5, %v1147
    %v1149 = vmul.f32 %v1144, %v1148
    %vm1150 = vweird.f32 %v1142
    %vm1151 = vweird.f32 %v1144
    %vm1152 = vmor %vm1150, %vm1151
    %v1153 = vsel %vm1152, %v1144, %v1149
    %v1154 = vrsqrt.pop %v1143
    %v1155 = vmul.f32 %v1154, %v1143
    %v1156 = vmul.f32 %v1155, %v1154
    %v1157 = vmul.f32 0.5, %v1156
    %v1158 = vsub.f32 1.5, %v1157
    %v1159 = vmul.f32 %v1154, %v1158
    %vm1160 = vweird.f32 %v1143
    %vm1161 = vweird.f32 %v1154
    %vm1162 = vmor %vm1160, %vm1161
    %v1163 = vsel %vm1162, %v1154, %v1159
    %v1164 = vmul.f32 %v1140, %v1153
    %v1165 = vmul.f32 %v1141, %v1163
    %v1166 = vperm.slane %v1116, 0
    %v1167 = vmul.f32 %v1164, %v1166
    %v1168 = vmul.f32 %v1165, %v1166
    %v1169 = vperm.slane %v1117, 0
    %v1170 = vadd.f32 %v1167, %v1169
    %v1171 = vadd.f32 %v1168, %v1169
    %v1172 = vpack.c.bf16 %v1171, %v1170
    %s1173 = scalar_lea.vmem [#allocation2], 96
    %v1174 = vld [vmem:[%s1173] sm:$0xf]
    %v1175 = vld [vmem:[%s1173 + $0x4] sm:$0xf]
    %v1176 = vld [vmem:[%s1173 + $0x8] sm:$0xf]
    %v1177 = vld [vmem:[%s1173 + $0xc] sm:$0xf]
    %v1178 = vld [vmem:[%s4 + $0xa] sm:$0x1]
    %v1179 = vperm.slane %v1178, 0
    %v1184 = vunpack.c.l.b16 %v1174
    %v1185 = vunpack.c.l.b16 %v1175
    %v1186 = vunpack.c.l.b16 %v1176
    %v1187 = vunpack.c.l.b16 %v1177
    %v1188 = vpack.c.b16 %v1185, %v1184
    %v1189 = vpack.c.b16 %v1187, %v1186
    %v1193 = vsel %vm69, %v1172, 0
    %1195 = vmatpush.bf16.msra.mxu0 0
    %1196 = vmatpush.bf16.msra.mxu0 0
    %1197 = vmatpush.bf16.msra.mxu0 0
    %1198 = vmatpush.bf16.msra.mxu0 0
    %1199 = vmatpush.bf16.msra.mxu0 0
    %1200 = vmatpush.bf16.msra.mxu0 0
    %1201 = vmatpush.bf16.msra.mxu0 %v1189
    %1202 = vmatpush.bf16.msra.mxu0 %v1188
    %1203 = vmatmul.bf16.gmra.mxu0 %v1193
    %v1204 = vpop.f32.mrf.mxu0
    %v1205 = vadd.f32 %v1179, %v1204
    %v1206 = vpop.f32.mrf.mxu0
    %v1207 = vadd.f32 %v1179, %v1206
    %1208 = vdwg.mxu0
    %v1209 = vmax.f32 %v1205, 0.0
    %v1210 = vmax.f32 %v1207, 0.0
    %v1211 = vpack.c.bf16 %v1210, %v1209
    %s1212 = scalar_lea.vmem [#allocation2], 112
    %v1213 = vld [vmem:[%s1212] sm:$0xf]
    %v1214 = vld [vmem:[%s1212 + $0x4] sm:$0xf]
    %v1215 = vld [vmem:[%s1212 + $0x8] sm:$0xf]
    %v1216 = vld [vmem:[%s1212 + $0xc] sm:$0xf]
    %v1217 = vld [vmem:[%s4 + $0xb] sm:$0x1]
    %v1218 = vperm.slane %v1217, 0
    %v1223 = vunpack.c.l.b16 %v1213
    %v1224 = vunpack.c.l.b16 %v1214
    %v1225 = vunpack.c.l.b16 %v1215
    %v1226 = vunpack.c.l.b16 %v1216
    %v1227 = vpack.c.b16 %v1224, %v1223
    %v1228 = vpack.c.b16 %v1226, %v1225
    %v1232 = vsel %vm69, %v1211, 0
    %1234 = vmatpush.bf16.msra.mxu0 0
    %1235 = vmatpush.bf16.msra.mxu0 0
    %1236 = vmatpush.bf16.msra.mxu0 0
    %1237 = vmatpush.bf16.msra.mxu0 0
    %1238 = vmatpush.bf16.msra.mxu0 0
    %1239 = vmatpush.bf16.msra.mxu0 0
    %1240 = vmatpush.bf16.msra.mxu0 %v1228
    %1241 = vmatpush.bf16.msra.mxu0 %v1227
    %1242 = vmatmul.bf16.gmra.mxu0 %v1232
    %v1243 = vpop.f32.mrf.mxu0
    %v1244 = vadd.f32 %v1218, %v1243
    %v1245 = vpop.f32.mrf.mxu0
    %v1246 = vadd.f32 %v1218, %v1245
    %1247 = vdwg.mxu0
    %v1248 = vadd.f32 %v1170, %v1244
    %v1249 = vadd.f32 %v1171, %v1246
    %v1250 = vld [vmem:[%s4 + $0xc] sm:$0x1]
    %v1251 = vld [vmem:[%s4 + $0xd] sm:$0x1]
    %v1252 = vsel %vm69, %v1248, 0.0
    %1253 = vadd.xlane.f32.xlu0 %v1252
    %v1254 = vpop.xlane.xlu0 %1253
    %v1255 = vsel %vm69, %v1249, 0.0
    %1256 = vadd.xlane.f32.xlu0 %v1255
    %v1257 = vpop.xlane.xlu0 %1256
    %v1258 = vmul.f32 %v1254, %v522
    %v1259 = vmul.f32 %v1257, %v522
    %v1260 = vmul.f32 %v1248, %v1248
    %v1261 = vmul.f32 %v1249, %v1249
    %v1262 = vsel %vm69, %v1260, 0.0
    %1263 = vadd.xlane.f32.xlu0 %v1262
    %v1264 = vpop.xlane.xlu0 %1263
    %v1265 = vsel %vm69, %v1261, 0.0
    %1266 = vadd.xlane.f32.xlu0 %v1265
    %v1267 = vpop.xlane.xlu0 %1266
    %v1268 = vmul.f32 %v1264, %v522
    %v1269 = vmul.f32 %v1267, %v522
    %v1270 = vmul.f32 %v1258, %v1258
    %v1271 = vmul.f32 %v1259, %v1259
    %v1272 = vsub.f32 %v1268, %v1270
    %v1273 = vsub.f32 %v1269, %v1271
    %v1274 = vsub.f32 %v1248, %v1258
    %v1275 = vsub.f32 %v1249, %v1259
    %v1276 = vadd.f32 %v1272, 1e-05
    %v1277 = vadd.f32 %v1273, 1e-05
    %v1278 = vrsqrt.pop %v1276
    %v1279 = vmul.f32 %v1278, %v1276
    %v1280 = vmul.f32 %v1279, %v1278
    %v1281 = vmul.f32 0.5, %v1280
    %v1282 = vsub.f32 1.5, %v1281
    %v1283 = vmul.f32 %v1278, %v1282
    %vm1284 = vweird.f32 %v1276
    %vm1285 = vweird.f32 %v1278
    %vm1286 = vmor %vm1284, %vm1285
    %v1287 = vsel %vm1286, %v1278, %v1283
    %v1288 = vrsqrt.pop %v1277
    %v1289 = vmul.f32 %v1288, %v1277
    %v1290 = vmul.f32 %v1289, %v1288
    %v1291 = vmul.f32 0.5, %v1290
    %v1292 = vsub.f32 1.5, %v1291
    %v1293 = vmul.f32 %v1288, %v1292
    %vm1294 = vweird.f32 %v1277
    %vm1295 = vweird.f32 %v1288
    %vm1296 = vmor %vm1294, %vm1295
    %v1297 = vsel %vm1296, %v1288, %v1293
    %v1298 = vmul.f32 %v1274, %v1287
    %v1299 = vmul.f32 %v1275, %v1297
    %v1300 = vperm.slane %v1250, 0
    %v1301 = vmul.f32 %v1298, %v1300
    %v1302 = vmul.f32 %v1299, %v1300
    %v1303 = vperm.slane %v1251, 0
    %v1304 = vadd.f32 %v1301, %v1303
    %v1305 = vadd.f32 %v1302, %v1303
    %v1306 = vpack.c.bf16 %v1305, %v1304
    %s1307 = scalar_lea.vmem [#allocation2], 16
    %v1308 = vld [vmem:[%s1307] sm:$0xf]
    %v1309 = vld [vmem:[%s1307 + $0x4] sm:$0xf]
    %v1310 = vld [vmem:[%s1307 + $0x8] sm:$0xf]
    %v1311 = vld [vmem:[%s1307 + $0xc] sm:$0xf]
    %v1312 = vld [vmem:[%s4 + $0xe] sm:$0x1]
    %v1313 = vperm.slane %v1312, 0
    %v1318 = vunpack.c.l.b16 %v1308
    %v1319 = vunpack.c.l.b16 %v1309
    %v1320 = vunpack.c.l.b16 %v1310
    %v1321 = vunpack.c.l.b16 %v1311
    %v1322 = vpack.c.b16 %v1319, %v1318
    %v1323 = vpack.c.b16 %v1321, %v1320
    %v1327 = vsel %vm69, %v1306, 0
    %1329 = vmatpush.bf16.msra.mxu0 0
    %1330 = vmatpush.bf16.msra.mxu0 0
    %1331 = vmatpush.bf16.msra.mxu0 0
    %1332 = vmatpush.bf16.msra.mxu0 0
    %1333 = vmatpush.bf16.msra.mxu0 0
    %1334 = vmatpush.bf16.msra.mxu0 0
    %1335 = vmatpush.bf16.msra.mxu0 %v1323
    %1336 = vmatpush.bf16.msra.mxu0 %v1322
    %1337 = vmatmul.bf16.gmra.mxu0 %v1327
    %v1338 = vpop.f32.mrf.mxu0
    %v1339 = vadd.f32 %v1313, %v1338
    %v1340 = vpop.f32.mrf.mxu0
    %v1341 = vadd.f32 %v1313, %v1340
    %1342 = vdwg.mxu0
    %1343 = vst.msk [vmem:[#allocation5] sm:$0xff] %vm69, %v1339
    %1344 = vst.msk [vmem:[#allocation5 + $0x8] sm:$0xff] %vm69, %v1341
    // Predicated region
    $region34: #{tpu_custom_call.1} parent=1 // pred_check
      _
    $region35: #{tpu_custom_call.1} parent=1 // pred_check_branch
      %1346 = sbr.rel (0) target = $region37
    $region36: #{tpu_custom_call.1} parent=1 // pred_region
      %1348 = vsyncadd [#allocation4], 0
      %s1349 = sshll.u32 [#allocation5], 4
      %s1350 = int_to_ptr.vmem [resolvable:$true] %s1349
      %s1351 = sshll.u32 %s7, 4
      %s1352 = int_to_ptr.hbm [resolvable:$true] %s1351
      %1357 = dma.vmem_to_hbm [thread:$0]  %s1350, 256, %s1352, [#allocation4], 128, 128, 8
    $region37: #{tpu_custom_call.1} parent=1 // pred_fallthru
      _
    // Predicated region
    $region38: #{tpu_custom_call.1} parent=1 // pred_check
      _
    $region39: #{tpu_custom_call.1} parent=1 // pred_check_branch
      %1359 = sbr.rel (0) target = $region41
    $region40: #{tpu_custom_call.1} parent=1 // pred_region
      %1361 = dma.done [#allocation4], 256
    $region41: #{tpu_custom_call.1} parent=1 // pred_fallthru
      _
    %1362 = vsyncpa [#allocation3], 1
    %1363 = vsyncpa [#allocation4], 1

</llo_original>
